<compile_context>
chip_gen: v7x
topology: tpu7x:2x2x1
jax: 0.10.0
libtpu: 0.0.40
codegen_flags: <defaults>
</compile_context>

<pallas_src>
import functools

import jax
import jax.numpy as jnp
from jax.experimental import pallas as pl
from jax.experimental.pallas import tpu as pltpu


def _round_up(x, m):
    return (x + m - 1) // m * m


# ---------------------------------------------------------------------------
# Pallas kernel: one (batch element, query-row tile) per grid step.
# ---------------------------------------------------------------------------
def _detector_kernel(neg_ref, hf_ref, hft_ref,
                     wp_ref, bp_ref, wr1_ref, wr2_ref, whead_ref, blab_ref,
                     labels_ref, locs_ref, *, tq, t1, pad, cs, compute_dtype):
    L = hf_ref.shape[1]
    H = hf_ref.shape[2]
    cd = compute_dtype

    # Query rows sliced from the resident full-sentence block (no separate hq stream).
    q_start = pl.multiple_of(pl.program_id(1) * tq, tq)
    hq = hf_ref[0, pl.ds(q_start, tq), :]                         # [tq, H] compute dtype

    # ---- Proposer -----------------------------------------------------------
    q0 = jax.nn.gelu(jnp.dot(hq, wp_ref[...], preferred_element_type=jnp.float32)
                     + bp_ref[...])                                # [tq, H] f32

    # ---- Regressor (residual refinement of the queries) ----------------------
    r = jax.nn.gelu(jnp.dot(q0.astype(cd), wr1_ref[...],
                            preferred_element_type=jnp.float32))
    q1 = q0 + jnp.dot(r.astype(cd), wr2_ref[...], preferred_element_type=jnp.float32)

    # ---- Predictor: fused head  [label (padded to `pad`) | start | end] -------
    head = jnp.dot(q1.astype(cd), whead_ref[...],
                   preferred_element_type=jnp.float32)             # [tq, pad + 2H]

    # label probabilities (softmax over types_num + 1)
    lab = head[:, :t1] + blab_ref[...]
    lab = jnp.exp(lab - jnp.max(lab, axis=-1, keepdims=True))
    labels_ref[0] = (lab / jnp.sum(lab, axis=-1, keepdims=True)).astype(labels_ref.dtype)

    # biaffine-style location scores against the (pre-transposed) sentence hiddens
    s_proj = head[:, pad:pad + H]                                  # [tq, H] f32
    e_proj = head[:, pad + H:pad + 2 * H]
    hft = hft_ref[0]                                               # [H, L]  compute dtype
    a = jnp.dot(s_proj.astype(cd), hft, preferred_element_type=jnp.float32)   # [tq, L]
    b = jnp.dot(e_proj.astype(cd), hft, preferred_element_type=jnp.float32)   # [tq, L]

    neg = neg_ref[0]                                               # [1, L] 0 / -1e9
    a = a + neg
    b = b + neg

    # Factorized joint softmax over (start, end).  The pair mask is separable
    # (m[s] * m[e]), so softmax_{s,e}(a[s] + b[e] + mask) == softmax_s(a+m) (x)
    # softmax_e(b+m): masked rows/cols underflow to exactly 0 either way, so this equals
    # the reference softmax over the full L*L logits.  Drops exp work from L^3 to L^2.
    pa = jnp.exp(a - jnp.max(a, axis=-1, keepdims=True))
    pa = pa / jnp.sum(pa, axis=-1, keepdims=True)                  # [tq, L]
    pb = jnp.exp(b - jnp.max(b, axis=-1, keepdims=True))
    pb = pb / jnp.sum(pb, axis=-1, keepdims=True)                  # [tq, L]

    # Outer product in start-index chunks: bounds the live f32 temp to [tq, cs, L] and
    # keeps each multiply immediately followed by its (bf16) store.
    pb3 = pb[:, None, :]                                           # hoisted broadcast
    for c0 in range(0, L, cs):                                     # static chunk loop
        c1 = min(L, c0 + cs)
        blk = pa[:, c0:c1, None] * pb3                             # [tq, c1-c0, L]
        locs_ref[0, :, c0:c1, :] = blk.astype(locs_ref.dtype)


# ---------------------------------------------------------------------------
# Sizing heuristics.
# ---------------------------------------------------------------------------
def _vmem_capacity_bytes():
    # 128 MiB on v5e/v6e, 64 MiB per TensorCore on v7x; conservative fallback.
    try:
        return int(pltpu.get_tpu_info().vmem_capacity_bytes)
    except Exception:  # hardware-info query only; never masks kernel errors
        return 64 * 2 ** 20


def _choose_tq(L, H, T1, P, cd_bytes, o_bytes, vmem_limit):
    """Largest query-row tile whose double-buffered locs block (+ temps) fits in VMEM."""
    budget = int(vmem_limit * 0.8)
    fixed = cd_bytes * (3 * H * H + H * (P + 2 * H))     # single-buffered weights
    fixed += 4 * (H + T1)                                # f32 biases
    fixed += 2 * 2 * L * H * cd_bytes                    # hiddens + hiddens^T (dbl-buf)
    fixed += 2 * 4 * L                                   # mask bias stream
    fixed += 4 * 2 ** 20                                 # chunk temp + compiler slack
    per_tq = 2 * L * L * o_bytes                         # locs out block (dbl-buf)
    per_tq += 2 * 4 * T1                                 # labels out block
    per_tq += 4 * (12 * H + 8 * L + P)                   # f32 activations per query row
    avail = budget - fixed
    if avail < per_tq * 8:
        avail = per_tq * 8                               # floor at the smallest tile
    tq = min(L, avail // per_tq)
    if tq >= L:
        return L
    for t in range(int(tq), 7, -1):                      # largest 8-aligned divisor of L
        if L % t == 0 and t % 8 == 0:
            return t
    return L                                             # no aligned divisor: single tile


def _choose_cs(L, tq, temp_budget=2 * 2 ** 20, max_chunks=32):
    """Start-index chunk size for the outer-product store (bounds the live f32 temp)."""
    cs = max(8, temp_budget // (tq * L * 4))
    cs = max(cs, _round_up((L + max_chunks - 1) // max_chunks, 8))
    return min(L, _round_up(cs, 8))


# ---------------------------------------------------------------------------
# pallas_call builder.
# ---------------------------------------------------------------------------
def _const_spec(shape):
    """Grid-invariant operand: single pipeline buffer (second buffer is dead VMEM)."""
    index_map = lambda b, r: (0,) * len(shape)
    try:
        return pl.BlockSpec(shape, index_map, pipeline_mode=pl.Buffered(1))
    except (TypeError, AttributeError, ValueError):      # older API without pipeline_mode
        return pl.BlockSpec(shape, index_map)


def _make_call(B, L, H, T1, P, tq, cs, compute_dtype, locs_dtype, vmem_limit):
    kernel = functools.partial(_detector_kernel, tq=tq, t1=T1, pad=P, cs=cs,
                               compute_dtype=compute_dtype)
    in_specs = [
        pl.BlockSpec((1, 1, L), lambda b, r: (b, 0, 0)),      # 1-D mask bias   [B,1,L]
        pl.BlockSpec((1, L, H), lambda b, r: (b, 0, 0)),      # hiddens         [B,L,H]
        pl.BlockSpec((1, H, L), lambda b, r: (b, 0, 0)),      # hiddens^T       [B,H,L]
        _const_spec((H, H)),                                  # w_prop
        _const_spec((1, H)),                                  # b_prop (f32)
        _const_spec((H, H)),                                  # w_reg1
        _const_spec((H, H)),                                  # w_reg2
        _const_spec((H, P + 2 * H)),                          # fused head weight
        _const_spec((1, T1)),                                 # b_label (f32)
    ]
    out_shape = (jax.ShapeDtypeStruct((B, L, T1), jnp.float32),
                 jax.ShapeDtypeStruct((B, L, L, L), locs_dtype))
    out_specs = (pl.BlockSpec((1, tq, T1), lambda b, r: (b, r, 0)),
                 pl.BlockSpec((1, tq, L, L), lambda b, r: (b, r, 0, 0)))
    return pl.pallas_call(
        kernel,
        out_shape=out_shape,
        grid=(B, L // tq),
        in_specs=in_specs,
        out_specs=out_specs,
        compiler_params=pltpu.CompilerParams(
            dimension_semantics=("parallel", "parallel"),
            vmem_limit_bytes=vmem_limit),
    )


# ---------------------------------------------------------------------------
# Wrapper (Detector.predict equivalent): returns (labels_pros, locs_pros).
# ---------------------------------------------------------------------------
def detector_predict(batch_hiddens, batch_masks, params, *, tq=None,
                     compute_dtype=jnp.bfloat16, locs_dtype=jnp.bfloat16):
    B, L, H = batch_hiddens.shape
    T1 = params["w_label"].shape[1]                     # types_num + 1
    P = _round_up(T1, 128)                              # 128-aligned label-head slot

    cd = jnp.dtype(compute_dtype)
    od = jnp.dtype(locs_dtype)

    vmem_cap = _vmem_capacity_bytes()
    vmem_limit = int(max(32 * 2 ** 20, vmem_cap - 16 * 2 ** 20))

    if tq is None:
        tq = _choose_tq(L, H, T1, P, cd.itemsize, od.itemsize, vmem_limit)
    elif L % tq or (tq % 8 and tq != L):
        raise ValueError(f"tq={tq} must divide L={L} and be a multiple of 8 (or equal L)")
    cs = _choose_cs(L, tq)

    # Only the separable 1-D additive mask bias is streamed (no [B,L,L] bias in HBM).
    neg = jnp.where(batch_masks.astype(jnp.float32) > 0, 0.0, -1e9)
    neg = neg.astype(jnp.float32).reshape(B, 1, L)

    hf = batch_hiddens.astype(cd)                       # [B, L, H]  (MXU operand dtype)
    hft = jnp.transpose(hf, (0, 2, 1))                  # [B, H, L]  pre-transposed RHS

    # Fused predictor head: [w_label padded to P | w_start | w_end]  -> (H, P + 2H)
    w_lab_pad = jnp.pad(params["w_label"], ((0, 0), (0, P - T1)))
    w_head = jnp.concatenate([w_lab_pad, params["w_start"], params["w_end"]], axis=1)

    args = (neg, hf, hft,
            params["w_prop"].astype(cd), params["b_prop"].astype(jnp.float32),
            params["w_reg1"].astype(cd), params["w_reg2"].astype(cd),
            w_head.astype(cd), params["b_label"].astype(jnp.float32))

    labels, locs4 = _make_call(B, L, H, T1, P, tq, cs, cd, od, vmem_limit)(*args)
    # Free (minor-dim merge) XLA reshape of the lane-dense 4-D block output.
    return labels, locs4.reshape(B, L, L * L)


# TODO(synk): Detector.forward's loss needs scipy.optimize.linear_sum_assignment
# (Hungarian matching) over per-sentence data-dependent target lists plus python-side set
# arithmetic; no Pallas equivalent, so it is not kernelized here.
# TODO(synk): decode/format/inverse_format are pure python list/dict post-processing
# (types2idx lookups, dedup); left out of the kernel by design.


# ---------------------------------------------------------------------------
# Pure-JAX reference (unfactorized full L*L softmax).  When compute_dtype != float32 it
# mirrors the kernel's mixed-precision cast points so the comparison isolates kernel
# correctness from the deliberate bf16 quantization.
# ---------------------------------------------------------------------------
def reference_predict(h, mask, p, compute_dtype=jnp.float32):
    cd = jnp.dtype(compute_dtype)
    c = (lambda x: x) if cd == jnp.float32 else (lambda x: x.astype(cd).astype(jnp.float32))
    hc = c(h)
    q0 = jax.nn.gelu(jnp.einsum("blh,hk->blk", hc, c(p["w_prop"])) + p["b_prop"][0])
    r = jax.nn.gelu(jnp.einsum("blh,hk->blk", c(q0), c(p["w_reg1"])))
    q1 = q0 + jnp.einsum("blh,hk->blk", c(r), c(p["w_reg2"]))
    labels = jax.nn.softmax(
        jnp.einsum("blh,ht->blt", c(q1), c(p["w_label"])) + p["b_label"][0], axis=-1)
    s_proj = jnp.einsum("blh,hk->blk", c(q1), c(p["w_start"]))
    e_proj = jnp.einsum("blh,hk->blk", c(q1), c(p["w_end"]))
    a = jnp.einsum("bih,bsh->bis", c(s_proj), hc)
    bm = jnp.einsum("bih,beh->bie", c(e_proj), hc)
    maskf = mask.astype(jnp.float32)
    bias = jnp.where((maskf[:, :, None] * maskf[:, None, :]) > 0, 0.0, -1e9)
    logits = a[:, :, :, None] + bm[:, :, None, :] + bias[:, None, :, :]
    B, L = h.shape[0], h.shape[1]
    locs = jax.nn.softmax(logits.reshape(B, L, L * L), axis=-1)
    return labels, locs


if __name__ == "__main__":
    B, L, H, T = 2, 16, 32, 4          # batch, sentence_length, hidden_size, types_num
    key = jax.random.PRNGKey(0)
    ks = jax.random.split(key, 10)

    batch_hiddens = jax.random.normal(ks[0], (B, L, H), jnp.float32)
    lengths = jnp.array([L, 12])
    batch_masks = (jnp.arange(L)[None, :] < lengths[:, None]).astype(jnp.float32)  # [B, L]

    scale = 1.0 / jnp.sqrt(jnp.float32(H))
    params = {
        "w_prop":  jax.random.normal(ks[1], (H, H), jnp.float32) * scale,
        "b_prop":  jax.random.normal(ks[2], (1, H), jnp.float32) * 0.02,
        "w_reg1":  jax.random.normal(ks[3], (H, H), jnp.float32) * scale,
        "w_reg2":  jax.random.normal(ks[4], (H, H), jnp.float32) * scale,
        "w_label": jax.random.normal(ks[5], (H, T + 1), jnp.float32) * scale,
        "b_label": jax.random.normal(ks[6], (1, T + 1), jnp.float32) * 0.02,
        "w_start": jax.random.normal(ks[7], (H, H), jnp.float32) * scale,
        "w_end":   jax.random.normal(ks[8], (H, H), jnp.float32) * scale,
    }

    # --- strict-semantics check: f32 compute + f32 locs; tq=8 exercises grid=(2, 2) ----
    labels32, locs32 = detector_predict(batch_hiddens, batch_masks, params, tq=8,
                                        compute_dtype=jnp.float32,
                                        locs_dtype=jnp.float32)
    jax.block_until_ready((labels32, locs32))
    ref_l, ref_p = reference_predict(batch_hiddens, batch_masks, params)
    assert labels32.shape == (B, L, T + 1)
    assert locs32.shape == (B, L, L * L)
    assert jnp.allclose(labels32, ref_l, rtol=2e-2, atol=2e-3)
    assert jnp.allclose(locs32, ref_p, rtol=2e-2, atol=2e-3)
    assert jnp.allclose(jnp.sum(labels32, -1), 1.0, atol=1e-3)
    assert jnp.allclose(jnp.sum(locs32, -1), 1.0, atol=1e-3)

    # --- default perf config: bf16 MXU operands + bf16 locs writeback, auto tq ----------
    labels_pros, locs_pros = detector_predict(batch_hiddens, batch_masks, params)
    jax.block_until_ready((labels_pros, locs_pros))
    ref_lb, ref_pb = reference_predict(batch_hiddens, batch_masks, params,
                                       compute_dtype=jnp.bfloat16)
    assert locs_pros.dtype == jnp.bfloat16
    assert jnp.allclose(labels_pros, ref_lb, rtol=2e-2, atol=2e-3)
    assert jnp.allclose(locs_pros.astype(jnp.float32), ref_pb, rtol=2e-2, atol=2e-3)
    assert jnp.allclose(jnp.sum(labels_pros, -1), 1.0, atol=1e-3)
    assert jnp.allclose(jnp.sum(locs_pros.astype(jnp.float32), -1), 1.0, atol=1e-2)

    print("KERNEL_OK")
</pallas_src>

<mosaic_0001>
module attributes {stable_mosaic.version = 11 : i64} {
  func.func @_detector_kernel(%arg0: i32, %arg1: i32, %arg2: memref<1x1x16xf32, #tpu.memory_space<vmem>>, %arg3: memref<1x16x32xf32, #tpu.memory_space<vmem>>, %arg4: memref<1x32x16xf32, #tpu.memory_space<vmem>>, %arg5: memref<32x32xf32, #tpu.memory_space<vmem>>, %arg6: memref<1x32xf32, #tpu.memory_space<vmem>>, %arg7: memref<32x32xf32, #tpu.memory_space<vmem>>, %arg8: memref<32x32xf32, #tpu.memory_space<vmem>>, %arg9: memref<32x192xf32, #tpu.memory_space<vmem>>, %arg10: memref<1x5xf32, #tpu.memory_space<vmem>>, %arg11: memref<1x8x5xf32, #tpu.memory_space<vmem>>, %arg12: memref<1x8x16x16xf32, #tpu.memory_space<vmem>>) attributes {dimension_semantics = [#tpu.dimension_semantics<parallel>, #tpu.dimension_semantics<parallel>], iteration_bounds = array<i64: 2, 2>, scalar_prefetch = 0 : i64, scratch_operands = 0 : i64, tpu.core_type = #tpu.core_type<tc>, window_params = [{transform_indices = @transform_0, window_bounds = array<i64: 1, 1, 16>}, {transform_indices = @transform_1, window_bounds = array<i64: 1, 16, 32>}, {transform_indices = @transform_2, window_bounds = array<i64: 1, 32, 16>}, {pipeline_mode = #tpu.pipeline_mode<synchronous>, transform_indices = @transform_3, window_bounds = array<i64: 32, 32>}, {pipeline_mode = #tpu.pipeline_mode<synchronous>, transform_indices = @transform_4, window_bounds = array<i64: 1, 32>}, {pipeline_mode = #tpu.pipeline_mode<synchronous>, transform_indices = @transform_5, window_bounds = array<i64: 32, 32>}, {pipeline_mode = #tpu.pipeline_mode<synchronous>, transform_indices = @transform_6, window_bounds = array<i64: 32, 32>}, {pipeline_mode = #tpu.pipeline_mode<synchronous>, transform_indices = @transform_7, window_bounds = array<i64: 32, 192>}, {pipeline_mode = #tpu.pipeline_mode<synchronous>, transform_indices = @transform_8, window_bounds = array<i64: 1, 5>}, {transform_indices = @transform_9, window_bounds = array<i64: 1, 8, 5>}, {transform_indices = @transform_10, window_bounds = array<i64: 1, 8, 16, 16>}]} {
    %c8_i32 = arith.constant 8 : i32
    %0 = arith.muli %arg1, %c8_i32 : i32
    %1 = tpu.assume_multiple %0, 8 : i32
    %c0 = arith.constant 0 : index
    %2 = arith.index_cast %1 : i32 to index
    %c0_0 = arith.constant 0 : index
    %3 = vector.load %arg3[%c0, %2, %c0_0] : memref<1x16x32xf32, #tpu.memory_space<vmem>>, vector<1x8x32xf32>
    %4 = vector.shape_cast %3 : vector<1x8x32xf32> to vector<8x32xf32>
    %c0_1 = arith.constant 0 : index
    %c0_2 = arith.constant 0 : index
    %5 = vector.load %arg5[%c0_1, %c0_2] : memref<32x32xf32, #tpu.memory_space<vmem>>, vector<32x32xf32>
    %cst = arith.constant dense<0.000000e+00> : vector<8x32xf32>
    %6 = tpu.matmul %4, %5, %cst {dimension_numbers = #tpu.dot_dimension_numbers<[1], [0], [0], [1], [0, 0, 1, 1], [], []>} : vector<8x32xf32>, vector<32x32xf32>, vector<8x32xf32> -> vector<8x32xf32>
    %c0_3 = arith.constant 0 : index
    %c0_4 = arith.constant 0 : index
    %7 = vector.load %arg6[%c0_3, %c0_4] : memref<1x32xf32, #tpu.memory_space<vmem>>, vector<1x32xf32>
    %8 = vector.broadcast %7 : vector<1x32xf32> to vector<8x32xf32>
    %9 = arith.addf %6, %8 : vector<8x32xf32>
    %10 = arith.mulf %9, %9 : vector<8x32xf32>
    %11 = arith.mulf %9, %10 : vector<8x32xf32>
    %cst_5 = arith.constant 4.471500e-02 : f32
    %12 = vector.broadcast %cst_5 : f32 to vector<8x32xf32>
    %13 = arith.mulf %12, %11 : vector<8x32xf32>
    %14 = arith.addf %9, %13 : vector<8x32xf32>
    %cst_6 = arith.constant 0.797884583 : f32
    %15 = vector.broadcast %cst_6 : f32 to vector<8x32xf32>
    %16 = arith.mulf %15, %14 : vector<8x32xf32>
    %17 = math.tanh %16 : vector<8x32xf32>
    %cst_7 = arith.constant 1.000000e+00 : f32
    %18 = vector.broadcast %cst_7 : f32 to vector<8x32xf32>
    %19 = arith.addf %18, %17 : vector<8x32xf32>
    %cst_8 = arith.constant 5.000000e-01 : f32
    %20 = vector.broadcast %cst_8 : f32 to vector<8x32xf32>
    %21 = arith.mulf %20, %19 : vector<8x32xf32>
    %22 = arith.mulf %9, %21 : vector<8x32xf32>
    %c0_9 = arith.constant 0 : index
    %c0_10 = arith.constant 0 : index
    %23 = vector.load %arg7[%c0_9, %c0_10] : memref<32x32xf32, #tpu.memory_space<vmem>>, vector<32x32xf32>
    %cst_11 = arith.constant dense<0.000000e+00> : vector<8x32xf32>
    %24 = tpu.matmul %22, %23, %cst_11 {dimension_numbers = #tpu.dot_dimension_numbers<[1], [0], [0], [1], [0, 0, 1, 1], [], []>} : vector<8x32xf32>, vector<32x32xf32>, vector<8x32xf32> -> vector<8x32xf32>
    %25 = arith.mulf %24, %24 : vector<8x32xf32>
    %26 = arith.mulf %24, %25 : vector<8x32xf32>
    %cst_12 = arith.constant 4.471500e-02 : f32
    %27 = vector.broadcast %cst_12 : f32 to vector<8x32xf32>
    %28 = arith.mulf %27, %26 : vector<8x32xf32>
    %29 = arith.addf %24, %28 : vector<8x32xf32>
    %cst_13 = arith.constant 0.797884583 : f32
    %30 = vector.broadcast %cst_13 : f32 to vector<8x32xf32>
    %31 = arith.mulf %30, %29 : vector<8x32xf32>
    %32 = math.tanh %31 : vector<8x32xf32>
    %cst_14 = arith.constant 1.000000e+00 : f32
    %33 = vector.broadcast %cst_14 : f32 to vector<8x32xf32>
    %34 = arith.addf %33, %32 : vector<8x32xf32>
    %cst_15 = arith.constant 5.000000e-01 : f32
    %35 = vector.broadcast %cst_15 : f32 to vector<8x32xf32>
    %36 = arith.mulf %35, %34 : vector<8x32xf32>
    %37 = arith.mulf %24, %36 : vector<8x32xf32>
    %c0_16 = arith.constant 0 : index
    %c0_17 = arith.constant 0 : index
    %38 = vector.load %arg8[%c0_16, %c0_17] : memref<32x32xf32, #tpu.memory_space<vmem>>, vector<32x32xf32>
    %cst_18 = arith.constant dense<0.000000e+00> : vector<8x32xf32>
    %39 = tpu.matmul %37, %38, %cst_18 {dimension_numbers = #tpu.dot_dimension_numbers<[1], [0], [0], [1], [0, 0, 1, 1], [], []>} : vector<8x32xf32>, vector<32x32xf32>, vector<8x32xf32> -> vector<8x32xf32>
    %40 = arith.addf %22, %39 : vector<8x32xf32>
    %c0_19 = arith.constant 0 : index
    %c0_20 = arith.constant 0 : index
    %41 = vector.load %arg9[%c0_19, %c0_20] : memref<32x192xf32, #tpu.memory_space<vmem>>, vector<32x192xf32>
    %cst_21 = arith.constant dense<0.000000e+00> : vector<8x192xf32>
    %42 = tpu.matmul %40, %41, %cst_21 {dimension_numbers = #tpu.dot_dimension_numbers<[1], [0], [0], [1], [0, 0, 1, 1], [], []>} : vector<8x32xf32>, vector<32x192xf32>, vector<8x192xf32> -> vector<8x192xf32>
    %43 = vector.extract_strided_slice %42 {offsets = [0, 0], sizes = [8, 5], strides = [1, 1]} : vector<8x192xf32> to vector<8x5xf32>
    %c0_22 = arith.constant 0 : index
    %c0_23 = arith.constant 0 : index
    %44 = vector.load %arg10[%c0_22, %c0_23] : memref<1x5xf32, #tpu.memory_space<vmem>>, vector<1x5xf32>
    %45 = vector.broadcast %44 : vector<1x5xf32> to vector<8x5xf32>
    %46 = arith.addf %43, %45 : vector<8x5xf32>
    %cst_24 = arith.constant dense<0xFF800000> : vector<8xf32>
    %47 = vector.multi_reduction <maximumf>, %46, %cst_24 [1] : vector<8x5xf32> to vector<8xf32>
    %48 = vector.shape_cast %47 : vector<8xf32> to vector<8x1xf32>
    %49 = vector.broadcast %48 : vector<8x1xf32> to vector<8x5xf32>
    %50 = arith.subf %46, %49 : vector<8x5xf32>
    %51 = math.exp %50 : vector<8x5xf32>
    %cst_25 = arith.constant dense<0.000000e+00> : vector<8xf32>
    %52 = vector.multi_reduction <add>, %51, %cst_25 [1] : vector<8x5xf32> to vector<8xf32>
    %53 = vector.shape_cast %52 : vector<8xf32> to vector<8x1xf32>
    %54 = vector.broadcast %53 : vector<8x1xf32> to vector<8x5xf32>
    %55 = arith.divf %51, %54 : vector<8x5xf32>
    %c0_26 = arith.constant 0 : index
    %c0_27 = arith.constant 0 : index
    %c0_28 = arith.constant 0 : index
    %56 = vector.load %arg11[%c0_26, %c0_27, %c0_28] : memref<1x8x5xf32, #tpu.memory_space<vmem>>, vector<1x8x5xf32>
    %57 = vector.shape_cast %56 : vector<1x8x5xf32> to vector<8x5xf32>
    %58 = vector.shape_cast %55 : vector<8x5xf32> to vector<1x8x5xf32>
    tpu.vector_store %arg11[%c0_26, %c0_27, %c0_28], %58 {strides = array<i32>} : memref<1x8x5xf32, #tpu.memory_space<vmem>>, vector<1x8x5xf32>,
    %59 = vector.extract_strided_slice %42 {offsets = [0, 128], sizes = [8, 32], strides = [1, 1]} : vector<8x192xf32> to vector<8x32xf32>
    %60 = vector.extract_strided_slice %42 {offsets = [0, 160], sizes = [8, 32], strides = [1, 1]} : vector<8x192xf32> to vector<8x32xf32>
    %c0_29 = arith.constant 0 : index
    %c0_30 = arith.constant 0 : index
    %c0_31 = arith.constant 0 : index
    %61 = vector.load %arg4[%c0_29, %c0_30, %c0_31] : memref<1x32x16xf32, #tpu.memory_space<vmem>>, vector<1x32x16xf32>
    %62 = vector.shape_cast %61 : vector<1x32x16xf32> to vector<32x16xf32>
    %cst_32 = arith.constant dense<0.000000e+00> : vector<8x16xf32>
    %63 = tpu.matmul %59, %62, %cst_32 {dimension_numbers = #tpu.dot_dimension_numbers<[1], [0], [0], [1], [0, 0, 1, 1], [], []>} : vector<8x32xf32>, vector<32x16xf32>, vector<8x16xf32> -> vector<8x16xf32>
    %cst_33 = arith.constant dense<0.000000e+00> : vector<8x16xf32>
    %64 = tpu.matmul %60, %62, %cst_33 {dimension_numbers = #tpu.dot_dimension_numbers<[1], [0], [0], [1], [0, 0, 1, 1], [], []>} : vector<8x32xf32>, vector<32x16xf32>, vector<8x16xf32> -> vector<8x16xf32>
    %c0_34 = arith.constant 0 : index
    %c0_35 = arith.constant 0 : index
    %c0_36 = arith.constant 0 : index
    %65 = vector.load %arg2[%c0_34, %c0_35, %c0_36] : memref<1x1x16xf32, #tpu.memory_space<vmem>>, vector<1x1x16xf32>
    %66 = vector.shape_cast %65 : vector<1x1x16xf32> to vector<1x16xf32>
    %67 = vector.broadcast %66 : vector<1x16xf32> to vector<8x16xf32>
    %68 = arith.addf %63, %67 : vector<8x16xf32>
    %69 = vector.broadcast %66 : vector<1x16xf32> to vector<8x16xf32>
    %70 = arith.addf %64, %69 : vector<8x16xf32>
    %cst_37 = arith.constant dense<0xFF800000> : vector<8xf32>
    %71 = vector.multi_reduction <maximumf>, %68, %cst_37 [1] : vector<8x16xf32> to vector<8xf32>
    %72 = vector.shape_cast %71 : vector<8xf32> to vector<8x1xf32>
    %73 = vector.broadcast %72 : vector<8x1xf32> to vector<8x16xf32>
    %74 = arith.subf %68, %73 : vector<8x16xf32>
    %75 = math.exp %74 : vector<8x16xf32>
    %cst_38 = arith.constant dense<0.000000e+00> : vector<8xf32>
    %76 = vector.multi_reduction <add>, %75, %cst_38 [1] : vector<8x16xf32> to vector<8xf32>
    %77 = vector.shape_cast %76 : vector<8xf32> to vector<8x1xf32>
    %78 = vector.broadcast %77 : vector<8x1xf32> to vector<8x16xf32>
    %79 = arith.divf %75, %78 : vector<8x16xf32>
    %cst_39 = arith.constant dense<0xFF800000> : vector<8xf32>
    %80 = vector.multi_reduction <maximumf>, %70, %cst_39 [1] : vector<8x16xf32> to vector<8xf32>
    %81 = vector.shape_cast %80 : vector<8xf32> to vector<8x1xf32>
    %82 = vector.broadcast %81 : vector<8x1xf32> to vector<8x16xf32>
    %83 = arith.subf %70, %82 : vector<8x16xf32>
    %84 = math.exp %83 : vector<8x16xf32>
    %cst_40 = arith.constant dense<0.000000e+00> : vector<8xf32>
    %85 = vector.multi_reduction <add>, %84, %cst_40 [1] : vector<8x16xf32> to vector<8xf32>
    %86 = vector.shape_cast %85 : vector<8xf32> to vector<8x1xf32>
    %87 = vector.broadcast %86 : vector<8x1xf32> to vector<8x16xf32>
    %88 = arith.divf %84, %87 : vector<8x16xf32>
    %89 = vector.shape_cast %88 : vector<8x16xf32> to vector<8x1x16xf32>
    %90 = vector.shape_cast %79 : vector<8x16xf32> to vector<8x16x1xf32>
    %91 = vector.broadcast %90 : vector<8x16x1xf32> to vector<8x16x16xf32>
    %92 = vector.broadcast %89 : vector<8x1x16xf32> to vector<8x16x16xf32>
    %93 = arith.mulf %91, %92 : vector<8x16x16xf32>
    %c0_41 = arith.constant 0 : index
    %c0_42 = arith.constant 0 : index
    %c0_43 = arith.constant 0 : index
    %c0_44 = arith.constant 0 : index
    %94 = vector.load %arg12[%c0_41, %c0_42, %c0_43, %c0_44] : memref<1x8x16x16xf32, #tpu.memory_space<vmem>>, vector<1x8x16x16xf32>
    %95 = vector.shape_cast %94 : vector<1x8x16x16xf32> to vector<8x16x16xf32>
    %96 = vector.shape_cast %93 : vector<8x16x16xf32> to vector<1x8x16x16xf32>
    tpu.vector_store %arg12[%c0_41, %c0_42, %c0_43, %c0_44], %96 {strides = array<i32>} : memref<1x8x16x16xf32, #tpu.memory_space<vmem>>, vector<1x8x16x16xf32>,
    return
  }
  func.func @transform_0(%arg0: i32, %arg1: i32) -> (i32, i32, i32) {
    %c0_i32 = arith.constant 0 : i32
    %c0_i32_0 = arith.constant 0 : i32
    %c0_i32_1 = arith.constant 0 : i32
    return %arg0, %c0_i32, %c0_i32_0 : i32, i32, i32
  }
  func.func @transform_1(%arg0: i32, %arg1: i32) -> (i32, i32, i32) {
    %c0_i32 = arith.constant 0 : i32
    %c0_i32_0 = arith.constant 0 : i32
    %c0_i32_1 = arith.constant 0 : i32
    return %arg0, %c0_i32, %c0_i32_0 : i32, i32, i32
  }
  func.func @transform_2(%arg0: i32, %arg1: i32) -> (i32, i32, i32) {
    %c0_i32 = arith.constant 0 : i32
    %c0_i32_0 = arith.constant 0 : i32
    %c0_i32_1 = arith.constant 0 : i32
    return %arg0, %c0_i32, %c0_i32_0 : i32, i32, i32
  }
  func.func @transform_3(%arg0: i32, %arg1: i32) -> (i32, i32) {
    %c0_i32 = arith.constant 0 : i32
    %c0_i32_0 = arith.constant 0 : i32
    %c0_i32_1 = arith.constant 0 : i32
    return %c0_i32, %c0_i32_0 : i32, i32
  }
  func.func @transform_4(%arg0: i32, %arg1: i32) -> (i32, i32) {
    %c0_i32 = arith.constant 0 : i32
    %c0_i32_0 = arith.constant 0 : i32
    %c0_i32_1 = arith.constant 0 : i32
    return %c0_i32, %c0_i32_0 : i32, i32
  }
  func.func @transform_5(%arg0: i32, %arg1: i32) -> (i32, i32) {
    %c0_i32 = arith.constant 0 : i32
    %c0_i32_0 = arith.constant 0 : i32
    %c0_i32_1 = arith.constant 0 : i32
    return %c0_i32, %c0_i32_0 : i32, i32
  }
  func.func @transform_6(%arg0: i32, %arg1: i32) -> (i32, i32) {
    %c0_i32 = arith.constant 0 : i32
    %c0_i32_0 = arith.constant 0 : i32
    %c0_i32_1 = arith.constant 0 : i32
    return %c0_i32, %c0_i32_0 : i32, i32
  }
  func.func @transform_7(%arg0: i32, %arg1: i32) -> (i32, i32) {
    %c0_i32 = arith.constant 0 : i32
    %c0_i32_0 = arith.constant 0 : i32
    %c0_i32_1 = arith.constant 0 : i32
    return %c0_i32, %c0_i32_0 : i32, i32
  }
  func.func @transform_8(%arg0: i32, %arg1: i32) -> (i32, i32) {
    %c0_i32 = arith.constant 0 : i32
    %c0_i32_0 = arith.constant 0 : i32
    %c0_i32_1 = arith.constant 0 : i32
    return %c0_i32, %c0_i32_0 : i32, i32
  }
  func.func @transform_9(%arg0: i32, %arg1: i32) -> (i32, i32, i32) {
    %c0_i32 = arith.constant 0 : i32
    %c0_i32_0 = arith.constant 0 : i32
    return %arg0, %arg1, %c0_i32 : i32, i32, i32
  }
  func.func @transform_10(%arg0: i32, %arg1: i32) -> (i32, i32, i32, i32) {
    %c0_i32 = arith.constant 0 : i32
    %c0_i32_0 = arith.constant 0 : i32
    %c0_i32_1 = arith.constant 0 : i32
    return %arg0, %arg1, %c0_i32, %c0_i32_0 : i32, i32, i32, i32
  }
}

</mosaic_0001>

<llo_original>
// kernel: tpu_custom_call.1
$region0: #{tpu_custom_call.1}
  #allocation0 [shape = 'u32[]', space=smem, size = 0x4, offset = 0x4, fixed_abs, tag = 'smem constant byte address 0x4 - core index']
  #allocation1 [shape = 'u32[144,128]{1,0:T(1,128)}', space=vmem, size = 0x12000, scoped, tag = 'internal scratch']
  %s0 = inlined_call_operand.vmem [shape: f32[2,1,16], index: 0, kind: input, shape index: {}]
  %s1 = inlined_call_operand.vmem [shape: f32[2,16,32], index: 1, kind: input, shape index: {}]
  %s2 = inlined_call_operand.vmem [shape: f32[2,32,16], index: 2, kind: input, shape index: {}]
  %s3 = inlined_call_operand.hbm [shape: f32[32,32], index: 3, kind: input, shape index: {}]
  %s4 = inlined_call_operand.vmem [shape: f32[1,32], index: 4, kind: input, shape index: {}]
  %s5 = inlined_call_operand.hbm [shape: f32[32,32], index: 5, kind: input, shape index: {}]
  %s6 = inlined_call_operand.hbm [shape: f32[32,32], index: 6, kind: input, shape index: {}]
  %s7 = inlined_call_operand.vmem [shape: f32[32,192], index: 7, kind: input, shape index: {}]
  %s8 = inlined_call_operand.vmem [shape: f32[1,5], index: 8, kind: input, shape index: {}]
  %s9 = inlined_call_operand.vmem [shape: f32[2,16,5], index: 9, kind: output, shape index: {0}]
  %s10 = inlined_call_operand.hbm [shape: f32[2,16,16,16], index: 10, kind: output, shape index: {1}]
  %11 = xla_tuple %s9, %s10
  %s12 = sld [smem:[#allocation0]]
  $region89: #{tpu_custom_call.1} parent=0
    _
  %s14 = ssub.s32 1, %s12
  %s15 = scalar_select 0, %s14, %s12
  $region1: #{tpu_custom_call.1} parent=0
    #allocation2 [shape = 'u8[16384]{0}', space=vmem, size = 0x4000, scoped, tag = 'input window, operand 3, single buffered']
    #allocation3 [shape = 's32[2]{0}', space=sflag, size = 0x8, scoped, tag = 'scoped memory for tpu_custom_call.1']
    #allocation4 [shape = 's32[2]{0}', space=sflag, size = 0x8, scoped, tag = 'scoped memory for tpu_custom_call.1']
    #allocation5 [shape = 'u8[16384]{0}', space=vmem, size = 0x4000, scoped, tag = 'input window, operand 5, single buffered']
    #allocation6 [shape = 's32[1]{0}', space=sflag, size = 0x4, scoped, tag = 'scoped memory for tpu_custom_call.1']
    #allocation7 [shape = 'u8[16384]{0}', space=vmem, size = 0x4000, scoped, tag = 'input window, operand 6, single buffered']
    #allocation8 [shape = 'u8[131072]{0}', space=vmem, size = 0x20000, scoped, tag = 'output window, operand 1']
    %16 = vsyncpa [#allocation3], 0
    %17 = vsyncpa [#allocation6], 0
    %18 = vsyncpa [#allocation4], 0
    %s19 = scalar_lea.sflag [#allocation4], 1
    %20 = vsyncpa %s19, 0
    loop: start=0, step=1, limit=6
    $region2: #{tpu_custom_call.1} parent=1 // loop_pre_header
      _
    $region3: #{tpu_custom_call.1} parent=1 // loop_header
      %s22 = sphi 0, %s26
      %p23 = scmp.ge.s32.totalorder %s22, 6
      %s29 = sphi 0, %s41
      %s30 = sphi 0, %s37
      %s31 = sphi 0, %s29
      %s32 = sphi 0, %s30
      %s33 = sphi 0, %s31
      %s34 = sphi 0, %s32
      %s44 = sphi 0, %s46
      %s47 = sphi 0, %s44
      %s48 = sphi 0, %s47
      %s64 = sphi 0, %s48
      %s70 = sphi 0, %s72
      %s73 = sphi 0, %s70
      %s74 = sphi 0, %s73
      %s90 = sphi 0, %s74
      %s96 = sphi 0, %s98
      %s99 = sphi 0, %s96
      %s100 = sphi 0, %s99
      %s116 = sphi 0, %s100
      %s120 = sphi 0, %s120
      %s122 = sphi 0, %s120
      %s123 = sphi 0, %s122
      %s137 = sphi 0, %s123
      %s141 = sphi 0, %s141
      %s143 = sphi 0, %s141
      %s144 = sphi 0, %s143
      %s158 = sphi 0, %s144
      %s162 = sphi 0, %s162
      %s164 = sphi 0, %s162
      %s165 = sphi 0, %s164
      %s179 = sphi 0, %s165
      %s183 = sphi 0, %s183
      %s185 = sphi 0, %s183
      %s186 = sphi 0, %s185
      %s200 = sphi 0, %s186
      %s204 = sphi 0, %s204
      %s206 = sphi 0, %s204
      %s207 = sphi 0, %s206
      %s221 = sphi 0, %s207
      %s225 = sphi 0, %s225
      %s227 = sphi 0, %s225
      %s228 = sphi 0, %s227
      %s242 = sphi 0, %s228
      %s250 = sphi 0, %s252
      %s253 = sphi 0, %s250
      %s254 = sphi 0, %s253
      %s270 = sphi 0, %s254
      %s278 = sphi 0, %s280
      %s281 = sphi 0, %s278
      %s282 = sphi 0, %s281
      %s298 = sphi 0, %s282
    $region4: #{tpu_custom_call.1} parent=1 // loop_header_branch
      %25 = sbr.rel (%p23) target = $region8
    $region5: #{tpu_custom_call.1} parent=1 // loop_body
      %s27 = ssub.s32 %s22, 1
      %s28 = ssub.s32 %s22, 2
      %s35 = sadd.s32 1, %s30
      %p36 = scmp.ge.s32.totalorder %s35, 2
      %s37 = scalar_select %p36, 0, %s35
      %s38 = sadd.s32 1, %s29
      %s39 = scalar_select %p36, %s38, %s29
      %p40 = scmp.ge.s32.totalorder %s39, 2
      %s41 = scalar_select %p40, 0, %s39
      %s42 = ssub.s32 %s29, %s41
      %p43 = scmp.eq.s32.totalorder %s42, 0
      %s45 = sadd.s32 %s44, 1
      %s46 = scalar_select %p43, %s44, %s45
      %p49 = pneg %p43
      %p50 = scmp.eq.s32.totalorder %s22, 3
      %p51 = por %p49, %p50
      %p52 = scmp.ne.s32.totalorder %s44, %s47
      %p53 = scmp.eq.s32.totalorder %s22, 0
      %p54 = por %p52, %p53
      %p55 = scmp.ne.s32.totalorder %s44, %s47
      %p56 = scmp.eq.s32.totalorder %s27, 3
      %p57 = por %p55, %p56
      %p58 = scmp.ne.s32.totalorder %s47, %s48
      %p59 = scmp.eq.s32.totalorder %s27, 0
      %p60 = por %p58, %p59
      %p61 = scmp.ne.s32.totalorder %s47, %s48
      %p62 = scmp.eq.s32.totalorder %s28, 3
      %p63 = por %p61, %p62
      %p65 = scmp.ne.s32.totalorder %s48, %s64
      %p66 = scmp.eq.s32.totalorder %s28, 0
      %p67 = por %p65, %p66
      %s68 = ssub.s32 %s29, %s41
      %p69 = scmp.eq.s32.totalorder %s68, 0
      %s71 = sadd.s32 %s70, 1
      %s72 = scalar_select %p69, %s70, %s71
      %p75 = pneg %p69
      %p76 = scmp.eq.s32.totalorder %s22, 3
      %p77 = por %p75, %p76
      %p78 = scmp.ne.s32.totalorder %s70, %s73
      %p79 = scmp.eq.s32.totalorder %s22, 0
      %p80 = por %p78, %p79
      %p81 = scmp.ne.s32.totalorder %s70, %s73
      %p82 = scmp.eq.s32.totalorder %s27, 3
      %p83 = por %p81, %p82
      %p84 = scmp.ne.s32.totalorder %s73, %s74
      %p85 = scmp.eq.s32.totalorder %s27, 0
      %p86 = por %p84, %p85
      %p87 = scmp.ne.s32.totalorder %s73, %s74
      %p88 = scmp.eq.s32.totalorder %s28, 3
      %p89 = por %p87, %p88
      %p91 = scmp.ne.s32.totalorder %s74, %s90
      %p92 = scmp.eq.s32.totalorder %s28, 0
      %p93 = por %p91, %p92
      %s94 = ssub.s32 %s29, %s41
      %p95 = scmp.eq.s32.totalorder %s94, 0
      %s97 = sadd.s32 %s96, 1
      %s98 = scalar_select %p95, %s96, %s97
      %p101 = pneg %p95
      %p102 = scmp.eq.s32.totalorder %s22, 3
      %p103 = por %p101, %p102
      %p104 = scmp.ne.s32.totalorder %s96, %s99
      %p105 = scmp.eq.s32.totalorder %s22, 0
      %p106 = por %p104, %p105
      %p107 = scmp.ne.s32.totalorder %s96, %s99
      %p108 = scmp.eq.s32.totalorder %s27, 3
      %p109 = por %p107, %p108
      %p110 = scmp.ne.s32.totalorder %s99, %s100
      %p111 = scmp.eq.s32.totalorder %s27, 0
      %p112 = por %p110, %p111
      %p113 = scmp.ne.s32.totalorder %s99, %s100
      %p114 = scmp.eq.s32.totalorder %s28, 3
      %p115 = por %p113, %p114
      %p117 = scmp.ne.s32.totalorder %s100, %s116
      %p118 = scmp.eq.s32.totalorder %s28, 0
      %p119 = por %p117, %p118
      %s121 = sadd.s32 %s120, 1
      %p124 = scmp.eq.s32.totalorder %s22, 3
      %p125 = scmp.ne.s32.totalorder %s120, %s122
      %p126 = scmp.eq.s32.totalorder %s22, 0
      %p127 = por %p125, %p126
      %p128 = scmp.ne.s32.totalorder %s120, %s122
      %p129 = scmp.eq.s32.totalorder %s27, 3
      %p130 = por %p128, %p129
      %p131 = scmp.ne.s32.totalorder %s122, %s123
      %p132 = scmp.eq.s32.totalorder %s27, 0
      %p133 = por %p131, %p132
      %p134 = scmp.ne.s32.totalorder %s122, %s123
      %p135 = scmp.eq.s32.totalorder %s28, 3
      %p136 = por %p134, %p135
      %p138 = scmp.ne.s32.totalorder %s123, %s137
      %p139 = scmp.eq.s32.totalorder %s28, 0
      %p140 = por %p138, %p139
      %s142 = sadd.s32 %s141, 1
      %p145 = scmp.eq.s32.totalorder %s22, 3
      %p146 = scmp.ne.s32.totalorder %s141, %s143
      %p147 = scmp.eq.s32.totalorder %s22, 0
      %p148 = por %p146, %p147
      %p149 = scmp.ne.s32.totalorder %s141, %s143
      %p150 = scmp.eq.s32.totalorder %s27, 3
      %p151 = por %p149, %p150
      %p152 = scmp.ne.s32.totalorder %s143, %s144
      %p153 = scmp.eq.s32.totalorder %s27, 0
      %p154 = por %p152, %p153
      %p155 = scmp.ne.s32.totalorder %s143, %s144
      %p156 = scmp.eq.s32.totalorder %s28, 3
      %p157 = por %p155, %p156
      %p159 = scmp.ne.s32.totalorder %s144, %s158
      %p160 = scmp.eq.s32.totalorder %s28, 0
      %p161 = por %p159, %p160
      %s163 = sadd.s32 %s162, 1
      %p166 = scmp.eq.s32.totalorder %s22, 3
      %p167 = scmp.ne.s32.totalorder %s162, %s164
      %p168 = scmp.eq.s32.totalorder %s22, 0
      %p169 = por %p167, %p168
      %p170 = scmp.ne.s32.totalorder %s162, %s164
      %p171 = scmp.eq.s32.totalorder %s27, 3
      %p172 = por %p170, %p171
      %p173 = scmp.ne.s32.totalorder %s164, %s165
      %p174 = scmp.eq.s32.totalorder %s27, 0
      %p175 = por %p173, %p174
      %p176 = scmp.ne.s32.totalorder %s164, %s165
      %p177 = scmp.eq.s32.totalorder %s28, 3
      %p178 = por %p176, %p177
      %p180 = scmp.ne.s32.totalorder %s165, %s179
      %p181 = scmp.eq.s32.totalorder %s28, 0
      %p182 = por %p180, %p181
      %s184 = sadd.s32 %s183, 1
      %p187 = scmp.eq.s32.totalorder %s22, 3
      %p188 = scmp.ne.s32.totalorder %s183, %s185
      %p189 = scmp.eq.s32.totalorder %s22, 0
      %p190 = por %p188, %p189
      %p191 = scmp.ne.s32.totalorder %s183, %s185
      %p192 = scmp.eq.s32.totalorder %s27, 3
      %p193 = por %p191, %p192
      %p194 = scmp.ne.s32.totalorder %s185, %s186
      %p195 = scmp.eq.s32.totalorder %s27, 0
      %p196 = por %p194, %p195
      %p197 = scmp.ne.s32.totalorder %s185, %s186
      %p198 = scmp.eq.s32.totalorder %s28, 3
      %p199 = por %p197, %p198
      %p201 = scmp.ne.s32.totalorder %s186, %s200
      %p202 = scmp.eq.s32.totalorder %s28, 0
      %p203 = por %p201, %p202
      %s205 = sadd.s32 %s204, 1
      %p208 = scmp.eq.s32.totalorder %s22, 3
      %p209 = scmp.ne.s32.totalorder %s204, %s206
      %p210 = scmp.eq.s32.totalorder %s22, 0
      %p211 = por %p209, %p210
      %p212 = scmp.ne.s32.totalorder %s204, %s206
      %p213 = scmp.eq.s32.totalorder %s27, 3
      %p214 = por %p212, %p213
      %p215 = scmp.ne.s32.totalorder %s206, %s207
      %p216 = scmp.eq.s32.totalorder %s27, 0
      %p217 = por %p215, %p216
      %p218 = scmp.ne.s32.totalorder %s206, %s207
      %p219 = scmp.eq.s32.totalorder %s28, 3
      %p220 = por %p218, %p219
      %p222 = scmp.ne.s32.totalorder %s207, %s221
      %p223 = scmp.eq.s32.totalorder %s28, 0
      %p224 = por %p222, %p223
      %s226 = sadd.s32 %s225, 1
      %p229 = scmp.eq.s32.totalorder %s22, 3
      %p230 = scmp.ne.s32.totalorder %s225, %s227
      %p231 = scmp.eq.s32.totalorder %s22, 0
      %p232 = por %p230, %p231
      %p233 = scmp.ne.s32.totalorder %s225, %s227
      %p234 = scmp.eq.s32.totalorder %s27, 3
      %p235 = por %p233, %p234
      %p236 = scmp.ne.s32.totalorder %s227, %s228
      %p237 = scmp.eq.s32.totalorder %s27, 0
      %p238 = por %p236, %p237
      %p239 = scmp.ne.s32.totalorder %s227, %s228
      %p240 = scmp.eq.s32.totalorder %s28, 3
      %p241 = por %p239, %p240
      %p243 = scmp.ne.s32.totalorder %s228, %s242
      %p244 = scmp.eq.s32.totalorder %s28, 0
      %p245 = por %p243, %p244
      %s246 = ssub.s32 %s29, %s41
      %s247 = ssub.s32 %s30, %s37
      %s248 = sor.u32 %s246, %s247
      %p249 = scmp.eq.s32.totalorder %s248, 0
      %s251 = sadd.s32 %s250, 1
      %s252 = scalar_select %p249, %s250, %s251
      %p255 = pneg %p249
      %p256 = scmp.eq.s32.totalorder %s22, 3
      %p257 = por %p255, %p256
      %p258 = scmp.ne.s32.totalorder %s250, %s253
      %p259 = scmp.eq.s32.totalorder %s22, 0
      %p260 = por %p258, %p259
      %p261 = scmp.ne.s32.totalorder %s250, %s253
      %p262 = scmp.eq.s32.totalorder %s27, 3
      %p263 = por %p261, %p262
      %p264 = scmp.ne.s32.totalorder %s253, %s254
      %p265 = scmp.eq.s32.totalorder %s27, 0
      %p266 = por %p264, %p265
      %p267 = scmp.ne.s32.totalorder %s253, %s254
      %p268 = scmp.eq.s32.totalorder %s28, 3
      %p269 = por %p267, %p268
      %p271 = scmp.ne.s32.totalorder %s254, %s270
      %p272 = scmp.eq.s32.totalorder %s28, 0
      %p273 = por %p271, %p272
      %s274 = ssub.s32 %s29, %s41
      %s275 = ssub.s32 %s30, %s37
      %s276 = sor.u32 %s274, %s275
      %p277 = scmp.eq.s32.totalorder %s276, 0
      %s279 = sadd.s32 %s278, 1
      %s280 = scalar_select %p277, %s278, %s279
      %p283 = pneg %p277
      %p284 = scmp.eq.s32.totalorder %s22, 3
      %p285 = por %p283, %p284
      %p286 = scmp.ne.s32.totalorder %s278, %s281
      %p287 = scmp.eq.s32.totalorder %s22, 0
      %p288 = por %p286, %p287
      %p289 = scmp.ne.s32.totalorder %s278, %s281
      %p290 = scmp.eq.s32.totalorder %s27, 3
      %p291 = por %p289, %p290
      %p292 = scmp.ne.s32.totalorder %s281, %s282
      %p293 = scmp.eq.s32.totalorder %s27, 0
      %p294 = por %p292, %p293
      %p295 = scmp.ne.s32.totalorder %s281, %s282
      %p296 = scmp.eq.s32.totalorder %s28, 3
      %p297 = por %p295, %p296
      %p299 = scmp.ne.s32.totalorder %s282, %s298
      %p300 = scmp.eq.s32.totalorder %s28, 0
      %p301 = por %p299, %p300
      %p302 = scmp.le.s32.totalorder 1, %s22
      %p303 = scmp.lt.s32.totalorder %s22, 5
      %p304 = pnand %p302, %p303
      %p305 = pneg %p304
      // Predicated region
      $region9: #{tpu_custom_call.1} parent=5 // pred_check
        _
      $region10: #{tpu_custom_call.1} parent=5 // pred_check_branch
        %307 = sbr.rel (%p304) target = $region12
      $region11: #{tpu_custom_call.1} parent=5 // pred_region
        %s308 = ssub.s32 %s22, 1
        // Predicated region
        $region13: #{tpu_custom_call.1} parent=11 // pred_check
          %p309 = pneg %p133
        $region14: #{tpu_custom_call.1} parent=11 // pred_check_branch
          %311 = sbr.rel (%p309) target = $region16
        $region15: #{tpu_custom_call.1} parent=11 // pred_region
          %s313 = ssub.s32 512, 512
          %314 = vsyncadd [#allocation3], %s313
          %s315 = sshll.u32 [#allocation2], 4
          %s316 = int_to_ptr.vmem [resolvable:$true] %s315
          %321 = dma.hbm_to_vmem [thread:$0]  %s3, 512, %s316, [#allocation3], 128, 128, 8
        $region16: #{tpu_custom_call.1} parent=11 // pred_fallthru
          _
        // Predicated region
        $region17: #{tpu_custom_call.1} parent=11 // pred_check
          %p322 = pneg %p154
        $region18: #{tpu_custom_call.1} parent=11 // pred_check_branch
          %324 = sbr.rel (%p322) target = $region20
        $region19: #{tpu_custom_call.1} parent=11 // pred_region
          _
        $region20: #{tpu_custom_call.1} parent=11 // pred_fallthru
          _
        // Predicated region
        $region21: #{tpu_custom_call.1} parent=11 // pred_check
          %p325 = pneg %p175
        $region22: #{tpu_custom_call.1} parent=11 // pred_check_branch
          %327 = sbr.rel (%p325) target = $region24
        $region23: #{tpu_custom_call.1} parent=11 // pred_region
          %s329 = ssub.s32 512, 512
          %330 = vsyncadd [#allocation6], %s329
          %s331 = sshll.u32 [#allocation5], 4
          %s332 = int_to_ptr.vmem [resolvable:$true] %s331
          %337 = dma.hbm_to_vmem [thread:$0]  %s5, 512, %s332, [#allocation6], 128, 128, 8
        $region24: #{tpu_custom_call.1} parent=11 // pred_fallthru
          _
        // Predicated region
        $region25: #{tpu_custom_call.1} parent=11 // pred_check
          %p338 = pneg %p196
        $region26: #{tpu_custom_call.1} parent=11 // pred_check_branch
          %340 = sbr.rel (%p338) target = $region28
        $region27: #{tpu_custom_call.1} parent=11 // pred_region
          %s342 = ssub.s32 512, 512
          %343 = vsyncadd [#allocation6], %s342
          %s344 = sshll.u32 [#allocation7], 4
          %s345 = int_to_ptr.vmem [resolvable:$true] %s344
          %350 = dma.hbm_to_vmem [thread:$0]  %s6, 512, %s345, [#allocation6], 128, 128, 8
        $region28: #{tpu_custom_call.1} parent=11 // pred_fallthru
          _
        // Predicated region
        $region29: #{tpu_custom_call.1} parent=11 // pred_check
          %p351 = pneg %p217
        $region30: #{tpu_custom_call.1} parent=11 // pred_check_branch
          %353 = sbr.rel (%p351) target = $region32
        $region31: #{tpu_custom_call.1} parent=11 // pred_region
          _
        $region32: #{tpu_custom_call.1} parent=11 // pred_fallthru
          _
        // Predicated region
        $region33: #{tpu_custom_call.1} parent=11 // pred_check
          %p354 = pneg %p238
        $region34: #{tpu_custom_call.1} parent=11 // pred_check_branch
          %356 = sbr.rel (%p354) target = $region36
        $region35: #{tpu_custom_call.1} parent=11 // pred_region
          _
        $region36: #{tpu_custom_call.1} parent=11 // pred_fallthru
          _
      $region12: #{tpu_custom_call.1} parent=5 // pred_fallthru
        _
      %p357 = scmp.lt.s32.totalorder %s22, 4
      // Predicated region
      $region37: #{tpu_custom_call.1} parent=5 // pred_check
        %p358 = pneg %p357
      $region38: #{tpu_custom_call.1} parent=5 // pred_check_branch
        %360 = sbr.rel (%p358) target = $region40
      $region39: #{tpu_custom_call.1} parent=5 // pred_region
        // Predicated region
        $region41: #{tpu_custom_call.1} parent=39 // pred_check
          %p361 = pneg %p54
        $region42: #{tpu_custom_call.1} parent=39 // pred_check_branch
          %363 = sbr.rel (%p361) target = $region44
        $region43: #{tpu_custom_call.1} parent=39 // pred_region
          %p364 = scmp.lt.s32.totalorder %s29, 1
          %s365 = scalar_select %p364, %s29, 1
          %s366 = scalar_lea.vmem %s0, %s365
        $region44: #{tpu_custom_call.1} parent=39 // pred_fallthru
          _
        // Predicated region
        $region45: #{tpu_custom_call.1} parent=39 // pred_check
          %p367 = pneg %p80
        $region46: #{tpu_custom_call.1} parent=39 // pred_check_branch
          %369 = sbr.rel (%p367) target = $region48
        $region47: #{tpu_custom_call.1} parent=39 // pred_region
          %p370 = scmp.lt.s32.totalorder %s29, 1
          %s371 = scalar_select %p370, %s29, 1
          %s372 = smul.addr %s371, 2
          %s373 = smul.addr %s372, 8
          %s374 = scalar_lea.vmem %s1, %s373
        $region48: #{tpu_custom_call.1} parent=39 // pred_fallthru
          _
        // Predicated region
        $region49: #{tpu_custom_call.1} parent=39 // pred_check
          %p375 = pneg %p106
        $region50: #{tpu_custom_call.1} parent=39 // pred_check_branch
          %377 = sbr.rel (%p375) target = $region52
        $region51: #{tpu_custom_call.1} parent=39 // pred_region
          %p378 = scmp.lt.s32.totalorder %s29, 1
          %s379 = scalar_select %p378, %s29, 1
          %s380 = smul.addr %s379, 4
          %s381 = smul.addr %s380, 8
          %s382 = scalar_lea.vmem %s2, %s381
        $region52: #{tpu_custom_call.1} parent=39 // pred_fallthru
          _
      $region40: #{tpu_custom_call.1} parent=5 // pred_fallthru
        _
      %p383 = scmp.le.s32.totalorder 1, %s22
      %p384 = scmp.lt.s32.totalorder %s22, 5
      %p385 = pnand %p383, %p384
      %p386 = pneg %p385
      // Predicated region
      $region53: #{tpu_custom_call.1} parent=5 // pred_check
        _
      $region54: #{tpu_custom_call.1} parent=5 // pred_check_branch
        %388 = sbr.rel (%p385) target = $region56
      $region55: #{tpu_custom_call.1} parent=5 // pred_region
        %s389 = ssub.s32 %s22, 1
        // Predicated region
        $region57: #{tpu_custom_call.1} parent=55 // pred_check
          %p390 = pneg %p133
        $region58: #{tpu_custom_call.1} parent=55 // pred_check_branch
          %392 = sbr.rel (%p390) target = $region60
        $region59: #{tpu_custom_call.1} parent=55 // pred_region
          %393 = dma.done [#allocation3], 512
        $region60: #{tpu_custom_call.1} parent=55 // pred_fallthru
          _
        // Predicated region
        $region61: #{tpu_custom_call.1} parent=55 // pred_check
          %p394 = pneg %p175
        $region62: #{tpu_custom_call.1} parent=55 // pred_check_branch
          %396 = sbr.rel (%p394) target = $region64
        $region63: #{tpu_custom_call.1} parent=55 // pred_region
          %397 = dma.done [#allocation6], 512
        $region64: #{tpu_custom_call.1} parent=55 // pred_fallthru
          _
        // Predicated region
        $region65: #{tpu_custom_call.1} parent=55 // pred_check
          %p398 = pneg %p196
        $region66: #{tpu_custom_call.1} parent=55 // pred_check_branch
          %400 = sbr.rel (%p398) target = $region68
        $region67: #{tpu_custom_call.1} parent=55 // pred_region
          %401 = dma.done [#allocation6], 512
        $region68: #{tpu_custom_call.1} parent=55 // pred_fallthru
          _
        %p402 = scmp.lt.s32.totalorder %s31, 1
        %s403 = scalar_select %p402, %s31, 1
        %s404 = scalar_lea.vmem %s0, %s403
        %p405 = pneg %p60
        %p406 = pneg %p57
        %p407 = scmp.lt.s32.totalorder %s31, 1
        %s408 = scalar_select %p407, %s31, 1
        %s409 = smul.addr %s408, 2
        %s410 = smul.addr %s409, 8
        %s411 = scalar_lea.vmem %s1, %s410
        %p412 = pneg %p86
        %p413 = pneg %p83
        %p414 = scmp.lt.s32.totalorder %s31, 1
        %s415 = scalar_select %p414, %s31, 1
        %s416 = smul.addr %s415, 4
        %s417 = smul.addr %s416, 8
        %s418 = scalar_lea.vmem %s2, %s417
        %p419 = pneg %p112
        %p420 = pneg %p109
        %p421 = pneg %p133
        %p422 = pneg %p130
        %p423 = pneg %p154
        %p424 = pneg %p151
        %p425 = pneg %p175
        %p426 = pneg %p172
        %p427 = pneg %p196
        %p428 = pneg %p193
        %p429 = pneg %p217
        %p430 = pneg %p214
        %p431 = pneg %p238
        %p432 = pneg %p235
        %p433 = pneg %p266
        %p434 = pneg %p263
        %p435 = scmp.lt.s32.totalorder %s31, 1
        %s436 = scalar_select %p435, %s31, 1
        %p437 = scmp.lt.s32.totalorder %s32, 1
        %s438 = scalar_select %p437, %s32, 1
        %s439 = smul.addr %s436, 2
        %s440 = sadd.s32 %s438, %s439
        %s441 = smul.addr %s440, 8
        %s442 = scalar_lea.vmem %s9, %s441
        %p443 = pneg %p294
        %p444 = pneg %p291
        %s445 = sand.u32 %s281, 1
        %s446 = scalar_lea.sflag [#allocation4], %s445
        %s447 = sand.u32 %s281, 1
        %s448 = smul.addr %s447, 128
        %s449 = scalar_lea.vmem [#allocation8], %s448
        %p450 = scmp.lt.s32.totalorder %s31, 1
        %s451 = scalar_select %p450, %s31, 1
        %s452 = scalar_lea.vmem %s0, %s451
        %p453 = scmp.lt.s32.totalorder %s31, 1
        %s454 = scalar_select %p453, %s31, 1
        %s455 = smul.addr %s454, 2
        %s456 = smul.addr %s455, 8
        %s457 = scalar_lea.vmem %s1, %s456
        %p458 = scmp.lt.s32.totalorder %s31, 1
        %s459 = scalar_select %p458, %s31, 1
        %s460 = smul.addr %s459, 4
        %s461 = smul.addr %s460, 8
        %s462 = scalar_lea.vmem %s2, %s461
        %p463 = scmp.lt.s32.totalorder %s31, 1
        %s464 = scalar_select %p463, %s31, 1
        %p465 = scmp.lt.s32.totalorder %s32, 1
        %s466 = scalar_select %p465, %s32, 1
        %s467 = smul.addr %s464, 2
        %s468 = sadd.s32 %s466, %s467
        %s469 = smul.addr %s468, 8
        %s470 = scalar_lea.vmem %s9, %s469
        %s471 = smul.u32 8, %s32
        %s472 = smul.u32 %s32, 8
        %s473 = scalar_lea.vmem %s457, %s472
        %v474 = vld [vmem:[%s473] sm:$0xff]
        %v475 = vld [vmem:[#allocation2] sm:$0xff]
        %v476 = vld [vmem:[#allocation2 + $0x8] sm:$0xff]
        %v477 = vld [vmem:[#allocation2 + $0x10] sm:$0xff]
        %v478 = vld [vmem:[#allocation2 + $0x18] sm:$0xff]
        %v479 = vld [vmem:[%s4] sm:$0x1]
        %v481 = vlaneseq
        %v482 = vshrl.u32 %v481, 7
        %v483 = vsub.s32 0, %v482
        %v484 = vrot.slane %v479, %v483
        %vm486 = vcmask 261120
        %v488 = vsel %vm486, %v474, 0
        %490 = vmatprep.subr.mxu0 0.0
        %491 = vmatpush1.msra.mxu0 %v475
        %492 = vmatprep.subr.mxu0 0.0
        %493 = vmatpush1.msra.mxu0 %v476
        %494 = vmatprep.subr.mxu0 0.0
        %495 = vmatpush1.msra.mxu0 %v477
        %496 = vmatprep.subr.mxu0 0.0
        %497 = vmatpush1.msra.mxu0 %v478
        %498 = vmatprep.subr.mxu0 0.0
        %499 = vmatpush1.msra.mxu0 0.0
        %500 = vmatprep.subr.mxu0 0.0
        %501 = vmatpush1.msra.mxu0 0.0
        %502 = vmatprep.subr.mxu0 0.0
        %503 = vmatpush1.msra.mxu0 0.0
        %504 = vmatprep.subr.mxu0 0.0
        %505 = vmatpush1.msra.mxu0 0.0
        %506 = vmatprep.subr.mxu0 0.0
        %507 = vmatpush1.msra.mxu0 0.0
        %508 = vmatprep.subr.mxu0 0.0
        %509 = vmatpush1.msra.mxu0 0.0
        %510 = vmatprep.subr.mxu0 0.0
        %511 = vmatpush1.msra.mxu0 0.0
        %512 = vmatprep.subr.mxu0 0.0
        %513 = vmatpush1.msra.mxu0 0.0
        %514 = vmatprep.subr.mxu0 0.0
        %515 = vmatpush1.msra.mxu0 0.0
        %516 = vmatprep.subr.mxu0 0.0
        %517 = vmatpush1.msra.mxu0 0.0
        %518 = vmatprep.subr.mxu0 0.0
        %519 = vmatpush1.msra.mxu0 0.0
        %520 = vmatprep.subr.mxu0 0.0
        %521 = vmatpush1.msra.mxu0 0.0
        %522 = vmatprep.subr.mxu0 0.0
        %523 = vmatpush1.msra.mxu0 0.0
        %524 = vmatprep.subr.mxu0 0.0
        %525 = vmatpush1.msra.mxu0 0.0
        %526 = vmatprep.subr.mxu0 0.0
        %527 = vmatpush1.msra.mxu0 0.0
        %528 = vmatprep.subr.mxu0 0.0
        %529 = vmatpush1.msra.mxu0 0.0
        %530 = vmatprep.subr.mxu0 0.0
        %531 = vmatpush1.msra.mxu0 0.0
        %532 = vmatprep.subr.mxu0 0.0
        %533 = vmatpush1.msra.mxu0 0.0
        %534 = vmatprep.subr.mxu0 0.0
        %535 = vmatpush1.msra.mxu0 0.0
        %536 = vmatprep.subr.mxu0 0.0
        %537 = vmatpush1.msra.mxu0 0.0
        %538 = vmatprep.subr.mxu0 0.0
        %539 = vmatpush1.msra.mxu0 0.0
        %540 = vmatprep.subr.mxu0 0.0
        %541 = vmatpush1.msra.mxu0 0.0
        %542 = vmatprep.subr.mxu0 0.0
        %543 = vmatpush1.msra.mxu0 0.0
        %544 = vmatprep.subr.mxu0 0.0
        %545 = vmatpush1.msra.mxu0 0.0
        %546 = vmatprep.subr.mxu0 0.0
        %547 = vmatpush1.msra.mxu0 0.0
        %548 = vmatprep.subr.mxu0 0.0
        %549 = vmatpush1.msra.mxu0 0.0
        %550 = vmatprep.subr.mxu0 0.0
        %551 = vmatpush1.msra.mxu0 0.0
        %552 = vmatprep.subr.mxu0 0.0
        %553 = vmatpush1.msra.mxu0 0.0
        %554 = vmatprep.mubr.f32.mxu0 0.0
        %555 = vmatmul.mubr.f32.gmra.mrb[0].mxu0 %v488
        %v556 = vpop.f32.mrb[0].mxu0
        %v557 = vadd.f32 %v484, %v556
        %v558 = vpop.f32.mrb[0].mxu0
        %559 = vdwg.mxu0
        %v560 = vmul.f32 %v557, %v557
        %v561 = vmul.f32 %v557, %v560
        %v562 = vmul.f32 %v561, 0.044715
        %v563 = vadd.f32 %v557, %v562
        %v564 = vmul.f32 %v563, 0.7978846
        %v565 = vtanh.pop %v564
        %v566 = vadd.f32 %v565, 1.0
        %v567 = vmul.f32 %v566, 0.5
        %v568 = vmul.f32 %v557, %v567
        %v569 = vld [vmem:[#allocation5] sm:$0xff]
        %v570 = vld [vmem:[#allocation5 + $0x8] sm:$0xff]
        %v571 = vld [vmem:[#allocation5 + $0x10] sm:$0xff]
        %v572 = vld [vmem:[#allocation5 + $0x18] sm:$0xff]
        %v574 = vsel %vm486, %v568, 0
        %576 = vmatprep.subr.mxu0 0.0
        %577 = vmatpush1.msra.mxu0 %v569
        %578 = vmatprep.subr.mxu0 0.0
        %579 = vmatpush1.msra.mxu0 %v570
        %580 = vmatprep.subr.mxu0 0.0
        %581 = vmatpush1.msra.mxu0 %v571
        %582 = vmatprep.subr.mxu0 0.0
        %583 = vmatpush1.msra.mxu0 %v572
        %584 = vmatprep.subr.mxu0 0.0
        %585 = vmatpush1.msra.mxu0 0.0
        %586 = vmatprep.subr.mxu0 0.0
        %587 = vmatpush1.msra.mxu0 0.0
        %588 = vmatprep.subr.mxu0 0.0
        %589 = vmatpush1.msra.mxu0 0.0
        %590 = vmatprep.subr.mxu0 0.0
        %591 = vmatpush1.msra.mxu0 0.0
        %592 = vmatprep.subr.mxu0 0.0
        %593 = vmatpush1.msra.mxu0 0.0
        %594 = vmatprep.subr.mxu0 0.0
        %595 = vmatpush1.msra.mxu0 0.0
        %596 = vmatprep.subr.mxu0 0.0
        %597 = vmatpush1.msra.mxu0 0.0
        %598 = vmatprep.subr.mxu0 0.0
        %599 = vmatpush1.msra.mxu0 0.0
        %600 = vmatprep.subr.mxu0 0.0
        %601 = vmatpush1.msra.mxu0 0.0
        %602 = vmatprep.subr.mxu0 0.0
        %603 = vmatpush1.msra.mxu0 0.0
        %604 = vmatprep.subr.mxu0 0.0
        %605 = vmatpush1.msra.mxu0 0.0
        %606 = vmatprep.subr.mxu0 0.0
        %607 = vmatpush1.msra.mxu0 0.0
        %608 = vmatprep.subr.mxu0 0.0
        %609 = vmatpush1.msra.mxu0 0.0
        %610 = vmatprep.subr.mxu0 0.0
        %611 = vmatpush1.msra.mxu0 0.0
        %612 = vmatprep.subr.mxu0 0.0
        %613 = vmatpush1.msra.mxu0 0.0
        %614 = vmatprep.subr.mxu0 0.0
        %615 = vmatpush1.msra.mxu0 0.0
        %616 = vmatprep.subr.mxu0 0.0
        %617 = vmatpush1.msra.mxu0 0.0
        %618 = vmatprep.subr.mxu0 0.0
        %619 = vmatpush1.msra.mxu0 0.0
        %620 = vmatprep.subr.mxu0 0.0
        %621 = vmatpush1.msra.mxu0 0.0
        %622 = vmatprep.subr.mxu0 0.0
        %623 = vmatpush1.msra.mxu0 0.0
        %624 = vmatprep.subr.mxu0 0.0
        %625 = vmatpush1.msra.mxu0 0.0
        %626 = vmatprep.subr.mxu0 0.0
        %627 = vmatpush1.msra.mxu0 0.0
        %628 = vmatprep.subr.mxu0 0.0
        %629 = vmatpush1.msra.mxu0 0.0
        %630 = vmatprep.subr.mxu0 0.0
        %631 = vmatpush1.msra.mxu0 0.0
        %632 = vmatprep.subr.mxu0 0.0
        %633 = vmatpush1.msra.mxu0 0.0
        %634 = vmatprep.subr.mxu0 0.0
        %635 = vmatpush1.msra.mxu0 0.0
        %636 = vmatprep.subr.mxu0 0.0
        %637 = vmatpush1.msra.mxu0 0.0
        %638 = vmatprep.subr.mxu0 0.0
        %639 = vmatpush1.msra.mxu0 0.0
        %640 = vmatprep.mubr.f32.mxu0 0.0
        %641 = vmatmul.mubr.f32.gmra.mrb[0].mxu0 %v574
        %v642 = vpop.f32.mrb[0].mxu0
        %v643 = vadd.f32 0.0, %v642
        %v644 = vpop.f32.mrb[0].mxu0
        %645 = vdwg.mxu0
        %v646 = vmul.f32 %v643, %v643
        %v647 = vmul.f32 %v643, %v646
        %v648 = vmul.f32 %v647, 0.044715
        %v649 = vadd.f32 %v643, %v648
        %v650 = vmul.f32 %v649, 0.7978846
        %v651 = vtanh.pop %v650
        %v652 = vadd.f32 %v651, 1.0
        %v653 = vmul.f32 %v652, 0.5
        %v654 = vmul.f32 %v643, %v653
        %v655 = vld [vmem:[#allocation7] sm:$0xff]
        %v656 = vld [vmem:[#allocation7 + $0x8] sm:$0xff]
        %v657 = vld [vmem:[#allocation7 + $0x10] sm:$0xff]
        %v658 = vld [vmem:[#allocation7 + $0x18] sm:$0xff]
        %v660 = vsel %vm486, %v654, 0
        %662 = vmatprep.subr.mxu0 0.0
        %663 = vmatpush1.msra.mxu0 %v655
        %664 = vmatprep.subr.mxu0 0.0
        %665 = vmatpush1.msra.mxu0 %v656
        %666 = vmatprep.subr.mxu0 0.0
        %667 = vmatpush1.msra.mxu0 %v657
        %668 = vmatprep.subr.mxu0 0.0
        %669 = vmatpush1.msra.mxu0 %v658
        %670 = vmatprep.subr.mxu0 0.0
        %671 = vmatpush1.msra.mxu0 0.0
        %672 = vmatprep.subr.mxu0 0.0
        %673 = vmatpush1.msra.mxu0 0.0
        %674 = vmatprep.subr.mxu0 0.0
        %675 = vmatpush1.msra.mxu0 0.0
        %676 = vmatprep.subr.mxu0 0.0
        %677 = vmatpush1.msra.mxu0 0.0
        %678 = vmatprep.subr.mxu0 0.0
        %679 = vmatpush1.msra.mxu0 0.0
        %680 = vmatprep.subr.mxu0 0.0
        %681 = vmatpush1.msra.mxu0 0.0
        %682 = vmatprep.subr.mxu0 0.0
        %683 = vmatpush1.msra.mxu0 0.0
        %684 = vmatprep.subr.mxu0 0.0
        %685 = vmatpush1.msra.mxu0 0.0
        %686 = vmatprep.subr.mxu0 0.0
        %687 = vmatpush1.msra.mxu0 0.0
        %688 = vmatprep.subr.mxu0 0.0
        %689 = vmatpush1.msra.mxu0 0.0
        %690 = vmatprep.subr.mxu0 0.0
        %691 = vmatpush1.msra.mxu0 0.0
        %692 = vmatprep.subr.mxu0 0.0
        %693 = vmatpush1.msra.mxu0 0.0
        %694 = vmatprep.subr.mxu0 0.0
        %695 = vmatpush1.msra.mxu0 0.0
        %696 = vmatprep.subr.mxu0 0.0
        %697 = vmatpush1.msra.mxu0 0.0
        %698 = vmatprep.subr.mxu0 0.0
        %699 = vmatpush1.msra.mxu0 0.0
        %700 = vmatprep.subr.mxu0 0.0
        %701 = vmatpush1.msra.mxu0 0.0
        %702 = vmatprep.subr.mxu0 0.0
        %703 = vmatpush1.msra.mxu0 0.0
        %704 = vmatprep.subr.mxu0 0.0
        %705 = vmatpush1.msra.mxu0 0.0
        %706 = vmatprep.subr.mxu0 0.0
        %707 = vmatpush1.msra.mxu0 0.0
        %708 = vmatprep.subr.mxu0 0.0
        %709 = vmatpush1.msra.mxu0 0.0
        %710 = vmatprep.subr.mxu0 0.0
        %711 = vmatpush1.msra.mxu0 0.0
        %712 = vmatprep.subr.mxu0 0.0
        %713 = vmatpush1.msra.mxu0 0.0
        %714 = vmatprep.subr.mxu0 0.0
        %715 = vmatpush1.msra.mxu0 0.0
        %716 = vmatprep.subr.mxu0 0.0
        %717 = vmatpush1.msra.mxu0 0.0
        %718 = vmatprep.subr.mxu0 0.0
        %719 = vmatpush1.msra.mxu0 0.0
        %720 = vmatprep.subr.mxu0 0.0
        %721 = vmatpush1.msra.mxu0 0.0
        %722 = vmatprep.subr.mxu0 0.0
        %723 = vmatpush1.msra.mxu0 0.0
        %724 = vmatprep.subr.mxu0 0.0
        %725 = vmatpush1.msra.mxu0 0.0
        %726 = vmatprep.mubr.f32.mxu0 0.0
        %727 = vmatmul.mubr.f32.gmra.mrb[0].mxu0 %v660
        %v728 = vpop.f32.mrb[0].mxu0
        %v729 = vadd.f32 0.0, %v728
        %v730 = vpop.f32.mrb[0].mxu0
        %731 = vdwg.mxu0
        %v732 = vadd.f32 %v568, %v729
        %v733 = vld [vmem:[%s7] sm:$0xff]
        %v734 = vld [vmem:[%s7 + $0x8] sm:$0xff]
        %v735 = vld [vmem:[%s7 + $0x10] sm:$0xff]
        %v736 = vld [vmem:[%s7 + $0x18] sm:$0xff]
        %v737 = vld [vmem:[%s7 + $0x20] sm:$0xff]
        %v738 = vld [vmem:[%s7 + $0x28] sm:$0xff]
        %v739 = vld [vmem:[%s7 + $0x30] sm:$0xff]
        %v740 = vld [vmem:[%s7 + $0x38] sm:$0xff]
        %v742 = vsel %vm486, %v732, 0
        %744 = vmatprep.subr.mxu0 %v734
        %745 = vmatpush1.msra.mxu0 %v733
        %746 = vmatprep.subr.mxu0 %v736
        %747 = vmatpush1.msra.mxu0 %v735
        %748 = vmatprep.subr.mxu0 %v738
        %749 = vmatpush1.msra.mxu0 %v737
        %750 = vmatprep.subr.mxu0 %v740
        %751 = vmatpush1.msra.mxu0 %v739
        %752 = vmatprep.subr.mxu0 0.0
        %753 = vmatpush1.msra.mxu0 0.0
        %754 = vmatprep.subr.mxu0 0.0
        %755 = vmatpush1.msra.mxu0 0.0
        %756 = vmatprep.subr.mxu0 0.0
        %757 = vmatpush1.msra.mxu0 0.0
        %758 = vmatprep.subr.mxu0 0.0
        %759 = vmatpush1.msra.mxu0 0.0
        %760 = vmatprep.subr.mxu0 0.0
        %761 = vmatpush1.msra.mxu0 0.0
        %762 = vmatprep.subr.mxu0 0.0
        %763 = vmatpush1.msra.mxu0 0.0
        %764 = vmatprep.subr.mxu0 0.0
        %765 = vmatpush1.msra.mxu0 0.0
        %766 = vmatprep.subr.mxu0 0.0
        %767 = vmatpush1.msra.mxu0 0.0
        %768 = vmatprep.subr.mxu0 0.0
        %769 = vmatpush1.msra.mxu0 0.0
        %770 = vmatprep.subr.mxu0 0.0
        %771 = vmatpush1.msra.mxu0 0.0
        %772 = vmatprep.subr.mxu0 0.0
        %773 = vmatpush1.msra.mxu0 0.0
        %774 = vmatprep.subr.mxu0 0.0
        %775 = vmatpush1.msra.mxu0 0.0
        %776 = vmatprep.subr.mxu0 0.0
        %777 = vmatpush1.msra.mxu0 0.0
        %778 = vmatprep.subr.mxu0 0.0
        %779 = vmatpush1.msra.mxu0 0.0
        %780 = vmatprep.subr.mxu0 0.0
        %781 = vmatpush1.msra.mxu0 0.0
        %782 = vmatprep.subr.mxu0 0.0
        %783 = vmatpush1.msra.mxu0 0.0
        %784 = vmatprep.subr.mxu0 0.0
        %785 = vmatpush1.msra.mxu0 0.0
        %786 = vmatprep.subr.mxu0 0.0
        %787 = vmatpush1.msra.mxu0 0.0
        %788 = vmatprep.subr.mxu0 0.0
        %789 = vmatpush1.msra.mxu0 0.0
        %790 = vmatprep.subr.mxu0 0.0
        %791 = vmatpush1.msra.mxu0 0.0
        %792 = vmatprep.subr.mxu0 0.0
        %793 = vmatpush1.msra.mxu0 0.0
        %794 = vmatprep.subr.mxu0 0.0
        %795 = vmatpush1.msra.mxu0 0.0
        %796 = vmatprep.subr.mxu0 0.0
        %797 = vmatpush1.msra.mxu0 0.0
        %798 = vmatprep.subr.mxu0 0.0
        %799 = vmatpush1.msra.mxu0 0.0
        %800 = vmatprep.subr.mxu0 0.0
        %801 = vmatpush1.msra.mxu0 0.0
        %802 = vmatprep.subr.mxu0 0.0
        %803 = vmatpush1.msra.mxu0 0.0
        %804 = vmatprep.subr.mxu0 0.0
        %805 = vmatpush1.msra.mxu0 0.0
        %806 = vmatprep.subr.mxu0 0.0
        %807 = vmatpush1.msra.mxu0 0.0
        %808 = vmatprep.mubr.f32.mxu0 0.0
        %809 = vmatmul.mubr.f32.gmra.mrb[0].mxu0 %v742
        %v810 = vpop.f32.mrb[0].mxu0
        %v811 = vadd.f32 0.0, %v810
        %v812 = vpop.f32.mrb[0].mxu0
        %v813 = vadd.f32 0.0, %v812
        %814 = vdwg.mxu0
        %v815 = vld [vmem:[%s8] sm:$0x1]
        %v817 = vlaneseq
        %v818 = vshrl.u32 %v817, 7
        %v819 = vsub.s32 0, %v818
        %v820 = vrot.slane %v815, %v819
        %v822 = vadd.f32 %v811, %v820
        %vm823 = vcmask 39936
        %v824 = vsel %vm823, %v822, -inf
        %825 = vmax.xlane.f32.xlu0 %v824
        %v826 = vpop.xlane.xlu0 %825
        %v827 = vsub.f32 %v822, %v826
        %v828 = vmul.f32 %v827, 1.442695
        %v829 = vpow.pop %v828
        %v830 = vsel %vm823, %v829, 0.0
        %831 = vadd.xlane.f32.xlu0 %v830
        %v832 = vpop.xlane.xlu0 %831
        %v833 = vrcp.pop %v832
        %v834 = vmul.f32 %v829, %v833
        %835 = vst.msk [vmem:[%s470] sm:$0xff] %vm823, %v834
        %v836 = vld [vmem:[%s462] sm:$0xff]
        %v837 = vld [vmem:[%s462 + $0x8] sm:$0xff]
        %v838 = vld [vmem:[%s462 + $0x10] sm:$0xff]
        %v839 = vld [vmem:[%s462 + $0x18] sm:$0xff]
        %v840 = vld [vmem:[%s452] sm:$0x1]
        %v842 = vlaneseq
        %v843 = vshrl.u32 %v842, 7
        %v844 = vsub.s32 0, %v843
        %v845 = vrot.slane %v840, %v844
        %v848 = vsel %vm486, %v813, 0
        %850 = vmatprep.subr.mxu0 0.0
        %851 = vmatpush1.msra.mxu0 %v836
        %852 = vmatprep.subr.mxu0 0.0
        %853 = vmatpush1.msra.mxu0 %v837
        %854 = vmatprep.subr.mxu0 0.0
        %855 = vmatpush1.msra.mxu0 %v838
        %856 = vmatprep.subr.mxu0 0.0
        %857 = vmatpush1.msra.mxu0 %v839
        %858 = vmatprep.subr.mxu0 0.0
        %859 = vmatpush1.msra.mxu0 0.0
        %860 = vmatprep.subr.mxu0 0.0
        %861 = vmatpush1.msra.mxu0 0.0
        %862 = vmatprep.subr.mxu0 0.0
        %863 = vmatpush1.msra.mxu0 0.0
        %864 = vmatprep.subr.mxu0 0.0
        %865 = vmatpush1.msra.mxu0 0.0
        %866 = vmatprep.subr.mxu0 0.0
        %867 = vmatpush1.msra.mxu0 0.0
        %868 = vmatprep.subr.mxu0 0.0
        %869 = vmatpush1.msra.mxu0 0.0
        %870 = vmatprep.subr.mxu0 0.0
        %871 = vmatpush1.msra.mxu0 0.0
        %872 = vmatprep.subr.mxu0 0.0
        %873 = vmatpush1.msra.mxu0 0.0
        %874 = vmatprep.subr.mxu0 0.0
        %875 = vmatpush1.msra.mxu0 0.0
        %876 = vmatprep.subr.mxu0 0.0
        %877 = vmatpush1.msra.mxu0 0.0
        %878 = vmatprep.subr.mxu0 0.0
        %879 = vmatpush1.msra.mxu0 0.0
        %880 = vmatprep.subr.mxu0 0.0
        %881 = vmatpush1.msra.mxu0 0.0
        %882 = vmatprep.subr.mxu0 0.0
        %883 = vmatpush1.msra.mxu0 0.0
        %884 = vmatprep.subr.mxu0 0.0
        %885 = vmatpush1.msra.mxu0 0.0
        %886 = vmatprep.subr.mxu0 0.0
        %887 = vmatpush1.msra.mxu0 0.0
        %888 = vmatprep.subr.mxu0 0.0
        %889 = vmatpush1.msra.mxu0 0.0
        %890 = vmatprep.subr.mxu0 0.0
        %891 = vmatpush1.msra.mxu0 0.0
        %892 = vmatprep.subr.mxu0 0.0
        %893 = vmatpush1.msra.mxu0 0.0
        %894 = vmatprep.subr.mxu0 0.0
        %895 = vmatpush1.msra.mxu0 0.0
        %896 = vmatprep.subr.mxu0 0.0
        %897 = vmatpush1.msra.mxu0 0.0
        %898 = vmatprep.subr.mxu0 0.0
        %899 = vmatpush1.msra.mxu0 0.0
        %900 = vmatprep.subr.mxu0 0.0
        %901 = vmatpush1.msra.mxu0 0.0
        %902 = vmatprep.subr.mxu0 0.0
        %903 = vmatpush1.msra.mxu0 0.0
        %904 = vmatprep.subr.mxu0 0.0
        %905 = vmatpush1.msra.mxu0 0.0
        %906 = vmatprep.subr.mxu0 0.0
        %907 = vmatpush1.msra.mxu0 0.0
        %908 = vmatprep.subr.mxu0 0.0
        %909 = vmatpush1.msra.mxu0 0.0
        %910 = vmatprep.subr.mxu0 0.0
        %911 = vmatpush1.msra.mxu0 0.0
        %912 = vmatprep.subr.mxu0 0.0
        %913 = vmatpush1.msra.mxu0 0.0
        %914 = vmatprep.mubr.f32.mxu0 0.0
        %915 = vmatmul.mubr.f32.gmra.mrb[0].mxu0 %v848
        %v916 = vpop.f32.mrb[0].mxu0
        %v917 = vadd.f32 %v845, %v916
        %v918 = vpop.f32.mrb[0].mxu0
        %919 = vdwg.mxu0
        %920 = vrot.lane.b32.xlu0 %v813, 96
        %v921 = vpop.permute.xlu0 %920
        %v922 = vsel %vm486, %v921, 0
        %924 = vmatprep.subr.mxu0 0.0
        %925 = vmatpush1.msra.mxu0 %v836
        %926 = vmatprep.subr.mxu0 0.0
        %927 = vmatpush1.msra.mxu0 %v837
        %928 = vmatprep.subr.mxu0 0.0
        %929 = vmatpush1.msra.mxu0 %v838
        %930 = vmatprep.subr.mxu0 0.0
        %931 = vmatpush1.msra.mxu0 %v839
        %932 = vmatprep.subr.mxu0 0.0
        %933 = vmatpush1.msra.mxu0 0.0
        %934 = vmatprep.subr.mxu0 0.0
        %935 = vmatpush1.msra.mxu0 0.0
        %936 = vmatprep.subr.mxu0 0.0
        %937 = vmatpush1.msra.mxu0 0.0
        %938 = vmatprep.subr.mxu0 0.0
        %939 = vmatpush1.msra.mxu0 0.0
        %940 = vmatprep.subr.mxu0 0.0
        %941 = vmatpush1.msra.mxu0 0.0
        %942 = vmatprep.subr.mxu0 0.0
        %943 = vmatpush1.msra.mxu0 0.0
        %944 = vmatprep.subr.mxu0 0.0
        %945 = vmatpush1.msra.mxu0 0.0
        %946 = vmatprep.subr.mxu0 0.0
        %947 = vmatpush1.msra.mxu0 0.0
        %948 = vmatprep.subr.mxu0 0.0
        %949 = vmatpush1.msra.mxu0 0.0
        %950 = vmatprep.subr.mxu0 0.0
        %951 = vmatpush1.msra.mxu0 0.0
        %952 = vmatprep.subr.mxu0 0.0
        %953 = vmatpush1.msra.mxu0 0.0
        %954 = vmatprep.subr.mxu0 0.0
        %955 = vmatpush1.msra.mxu0 0.0
        %956 = vmatprep.subr.mxu0 0.0
        %957 = vmatpush1.msra.mxu0 0.0
        %958 = vmatprep.subr.mxu0 0.0
        %959 = vmatpush1.msra.mxu0 0.0
        %960 = vmatprep.subr.mxu0 0.0
        %961 = vmatpush1.msra.mxu0 0.0
        %962 = vmatprep.subr.mxu0 0.0
        %963 = vmatpush1.msra.mxu0 0.0
        %964 = vmatprep.subr.mxu0 0.0
        %965 = vmatpush1.msra.mxu0 0.0
        %966 = vmatprep.subr.mxu0 0.0
        %967 = vmatpush1.msra.mxu0 0.0
        %968 = vmatprep.subr.mxu0 0.0
        %969 = vmatpush1.msra.mxu0 0.0
        %970 = vmatprep.subr.mxu0 0.0
        %971 = vmatpush1.msra.mxu0 0.0
        %972 = vmatprep.subr.mxu0 0.0
        %973 = vmatpush1.msra.mxu0 0.0
        %974 = vmatprep.subr.mxu0 0.0
        %975 = vmatpush1.msra.mxu0 0.0
        %976 = vmatprep.subr.mxu0 0.0
        %977 = vmatpush1.msra.mxu0 0.0
        %978 = vmatprep.subr.mxu0 0.0
        %979 = vmatpush1.msra.mxu0 0.0
        %980 = vmatprep.subr.mxu0 0.0
        %981 = vmatpush1.msra.mxu0 0.0
        %982 = vmatprep.subr.mxu0 0.0
        %983 = vmatpush1.msra.mxu0 0.0
        %984 = vmatprep.subr.mxu0 0.0
        %985 = vmatpush1.msra.mxu0 0.0
        %986 = vmatprep.subr.mxu0 0.0
        %987 = vmatpush1.msra.mxu0 0.0
        %988 = vmatprep.mubr.f32.mxu0 0.0
        %989 = vmatmul.mubr.f32.gmra.mrb[0].mxu0 %v922
        %v990 = vpop.f32.mrb[0].mxu0
        %v991 = vadd.f32 %v845, %v990
        %v992 = vpop.f32.mrb[0].mxu0
        %993 = vdwg.mxu0
        %vm994 = vcmask 130048
        %v995 = vsel %vm994, %v917, -inf
        %996 = vmax.xlane.f32.xlu0 %v995
        %v997 = vpop.xlane.xlu0 %996
        %v998 = vsub.f32 %v917, %v997
        %v999 = vmul.f32 %v998, 1.442695
        %v1000 = vpow.pop %v999
        %v1001 = vsel %vm994, %v1000, 0.0
        %1002 = vadd.xlane.f32.xlu0 %v1001
        %v1003 = vpop.xlane.xlu0 %1002
        %v1004 = vrcp.pop %v1003
        %v1005 = vmul.f32 %v1000, %v1004
        %v1006 = vsel %vm994, %v991, -inf
        %1007 = vmax.xlane.f32.xlu0 %v1006
        %v1008 = vpop.xlane.xlu0 %1007
        %v1009 = vsub.f32 %v991, %v1008
        %v1010 = vmul.f32 %v1009, 1.442695
        %v1011 = vpow.pop %v1010
        %v1012 = vsel %vm994, %v1011, 0.0
        %1013 = vadd.xlane.f32.xlu0 %v1012
        %v1014 = vpop.xlane.xlu0 %1013
        %v1015 = vrcp.pop %v1014
        %v1016 = vmul.f32 %v1011, %v1015
        %v1018 = vcombine.high %v1016, %v1016
        %v1020 = vunpack.c.l.s4 1966171168
        %v1021 = vunpack.c.0.s8 %v1020
        %v1022 = vlaneseq
        %v1023 = vshrl.u32 %v1022, 7
        %v1024 = vsub.s32 %v1021, %v1023
        %v1025 = vrot.slane %v1016, %v1024
        %v1027 = vunpack.c.l.s4 1966171168
        %v1028 = vunpack.c.0.s8 %v1027
        %v1029 = vlaneseq
        %v1030 = vshrl.u32 %v1029, 7
        %v1031 = vsub.s32 %v1028, %v1030
        %v1032 = vrot.slane %v1018, %v1031
        %v1033 = vcombine.high %v1025, %v1025
        %v1034 = vcombine.high %v1032, %v1032
        %v1036 = vunpack.c.l.s4 1966171168
        %v1037 = vunpack.c.0.s8 %v1036
        %v1038 = vlaneseq
        %v1039 = vshrl.u32 %v1038, 7
        %v1040 = vsub.s32 %v1037, %v1039
        %v1041 = vrot.slane %v1025, %v1040
        %v1043 = vunpack.c.l.s4 1966171168
        %v1044 = vunpack.c.0.s8 %v1043
        %v1045 = vlaneseq
        %v1046 = vshrl.u32 %v1045, 7
        %v1047 = vsub.s32 %v1044, %v1046
        %v1048 = vrot.slane %v1032, %v1047
        %v1050 = vunpack.c.l.s4 1966171168
        %v1051 = vunpack.c.0.s8 %v1050
        %v1052 = vlaneseq
        %v1053 = vshrl.u32 %v1052, 7
        %v1054 = vsub.s32 %v1051, %v1053
        %v1055 = vrot.slane %v1033, %v1054
        %v1057 = vunpack.c.l.s4 1966171168
        %v1058 = vunpack.c.0.s8 %v1057
        %v1059 = vlaneseq
        %v1060 = vshrl.u32 %v1059, 7
        %v1061 = vsub.s32 %v1058, %v1060
        %v1062 = vrot.slane %v1034, %v1061
        %v1063 = vcombine.high %v1041, %v1041
        %v1064 = vcombine.high %v1048, %v1048
        %v1065 = vcombine.high %v1055, %v1055
        %v1066 = vcombine.high %v1062, %v1062
        %v1067 = vlaneseq
        %v1068 = vshrl.u32 %v1067, 7
        %v1069 = vsub.s32 0, %v1068
        %v1070 = vrot.slane %v1005, %v1069
        %1072 = vbcast.lane.b32.xlu0 %v1070, 256
        %v1073 = vpop.permute.xlu0 %1072
        %s1075 = sor.u32 256, 8
        %1076 = vbcast.lane.b32.xlu0 %v1070, %s1075
        %v1077 = vpop.permute.xlu0 %1076
        %v1078 = vlaneseq
        %v1079 = vshrl.u32 %v1078, 7
        %v1080 = vsub.s32 1, %v1079
        %v1081 = vrot.slane %v1005, %v1080
        %1083 = vbcast.lane.b32.xlu0 %v1081, 256
        %v1084 = vpop.permute.xlu0 %1083
        %s1086 = sor.u32 256, 8
        %1087 = vbcast.lane.b32.xlu0 %v1081, %s1086
        %v1088 = vpop.permute.xlu0 %1087
        %v1089 = vlaneseq
        %v1090 = vshrl.u32 %v1089, 7
        %v1091 = vsub.s32 2, %v1090
        %v1092 = vrot.slane %v1005, %v1091
        %1094 = vbcast.lane.b32.xlu0 %v1092, 256
        %v1095 = vpop.permute.xlu0 %1094
        %s1097 = sor.u32 256, 8
        %1098 = vbcast.lane.b32.xlu0 %v1092, %s1097
        %v1099 = vpop.permute.xlu0 %1098
        %v1100 = vlaneseq
        %v1101 = vshrl.u32 %v1100, 7
        %v1102 = vsub.s32 3, %v1101
        %v1103 = vrot.slane %v1005, %v1102
        %1105 = vbcast.lane.b32.xlu0 %v1103, 256
        %v1106 = vpop.permute.xlu0 %1105
        %s1108 = sor.u32 256, 8
        %1109 = vbcast.lane.b32.xlu0 %v1103, %s1108
        %v1110 = vpop.permute.xlu0 %1109
        %v1111 = vlaneseq
        %v1112 = vshrl.u32 %v1111, 7
        %v1113 = vsub.s32 4, %v1112
        %v1114 = vrot.slane %v1005, %v1113
        %1116 = vbcast.lane.b32.xlu0 %v1114, 256
        %v1117 = vpop.permute.xlu0 %1116
        %s1119 = sor.u32 256, 8
        %1120 = vbcast.lane.b32.xlu0 %v1114, %s1119
        %v1121 = vpop.permute.xlu0 %1120
        %v1122 = vlaneseq
        %v1123 = vshrl.u32 %v1122, 7
        %v1124 = vsub.s32 5, %v1123
        %v1125 = vrot.slane %v1005, %v1124
        %1127 = vbcast.lane.b32.xlu0 %v1125, 256
        %v1128 = vpop.permute.xlu0 %1127
        %s1130 = sor.u32 256, 8
        %1131 = vbcast.lane.b32.xlu0 %v1125, %s1130
        %v1132 = vpop.permute.xlu0 %1131
        %v1133 = vlaneseq
        %v1134 = vshrl.u32 %v1133, 7
        %v1135 = vsub.s32 6, %v1134
        %v1136 = vrot.slane %v1005, %v1135
        %1138 = vbcast.lane.b32.xlu0 %v1136, 256
        %v1139 = vpop.permute.xlu0 %1138
        %s1141 = sor.u32 256, 8
        %1142 = vbcast.lane.b32.xlu0 %v1136, %s1141
        %v1143 = vpop.permute.xlu0 %1142
        %v1144 = vlaneseq
        %v1145 = vshrl.u32 %v1144, 7
        %v1146 = vsub.s32 7, %v1145
        %v1147 = vrot.slane %v1005, %v1146
        %1149 = vbcast.lane.b32.xlu0 %v1147, 256
        %v1150 = vpop.permute.xlu0 %1149
        %s1152 = sor.u32 256, 8
        %1153 = vbcast.lane.b32.xlu0 %v1147, %s1152
        %v1154 = vpop.permute.xlu0 %1153
        %v1155 = vlaneseq
        %v1156 = vshrl.u32 %v1155, 7
        %v1157 = vsub.s32 0, %v1156
        %v1158 = vrot.slane %v1041, %v1157
        %v1159 = vlaneseq
        %v1160 = vshrl.u32 %v1159, 7
        %v1161 = vsub.s32 0, %v1160
        %v1162 = vrot.slane %v1055, %v1161
        %v1163 = vlaneseq
        %v1164 = vshrl.u32 %v1163, 7
        %v1165 = vsub.s32 0, %v1164
        %v1166 = vrot.slane %v1063, %v1165
        %v1167 = vlaneseq
        %v1168 = vshrl.u32 %v1167, 7
        %v1169 = vsub.s32 0, %v1168
        %v1170 = vrot.slane %v1065, %v1169
        %v1171 = vlaneseq
        %v1172 = vshrl.u32 %v1171, 7
        %v1173 = vsub.s32 0, %v1172
        %v1174 = vrot.slane %v1048, %v1173
        %v1175 = vlaneseq
        %v1176 = vshrl.u32 %v1175, 7
        %v1177 = vsub.s32 0, %v1176
        %v1178 = vrot.slane %v1062, %v1177
        %v1179 = vlaneseq
        %v1180 = vshrl.u32 %v1179, 7
        %v1181 = vsub.s32 0, %v1180
        %v1182 = vrot.slane %v1064, %v1181
        %v1183 = vlaneseq
        %v1184 = vshrl.u32 %v1183, 7
        %v1185 = vsub.s32 0, %v1184
        %v1186 = vrot.slane %v1066, %v1185
        %v1195 = vmul.f32 %v1073, %v1158
        %v1196 = vmul.f32 %v1077, %v1158
        %v1197 = vmul.f32 %v1084, %v1162
        %v1198 = vmul.f32 %v1088, %v1162
        %v1199 = vmul.f32 %v1095, %v1166
        %v1200 = vmul.f32 %v1099, %v1166
        %v1201 = vmul.f32 %v1106, %v1170
        %v1202 = vmul.f32 %v1110, %v1170
        %v1203 = vmul.f32 %v1117, %v1174
        %v1204 = vmul.f32 %v1121, %v1174
        %v1205 = vmul.f32 %v1128, %v1178
        %v1206 = vmul.f32 %v1132, %v1178
        %v1207 = vmul.f32 %v1139, %v1182
        %v1208 = vmul.f32 %v1143, %v1182
        %v1209 = vmul.f32 %v1150, %v1186
        %v1210 = vmul.f32 %v1154, %v1186
        %1211 = vst.msk [vmem:[%s449] sm:$0xff] %vm994, %v1195
        %1212 = vst.msk [vmem:[%s449 + $0x8] sm:$0xff] %vm994, %v1196
        %1213 = vst.msk [vmem:[%s449 + $0x10] sm:$0xff] %vm994, %v1197
        %1214 = vst.msk [vmem:[%s449 + $0x18] sm:$0xff] %vm994, %v1198
        %1215 = vst.msk [vmem:[%s449 + $0x20] sm:$0xff] %vm994, %v1199
        %1216 = vst.msk [vmem:[%s449 + $0x28] sm:$0xff] %vm994, %v1200
        %1217 = vst.msk [vmem:[%s449 + $0x30] sm:$0xff] %vm994, %v1201
        %1218 = vst.msk [vmem:[%s449 + $0x38] sm:$0xff] %vm994, %v1202
        %1219 = vst.msk [vmem:[%s449 + $0x40] sm:$0xff] %vm994, %v1203
        %1220 = vst.msk [vmem:[%s449 + $0x48] sm:$0xff] %vm994, %v1204
        %1221 = vst.msk [vmem:[%s449 + $0x50] sm:$0xff] %vm994, %v1205
        %1222 = vst.msk [vmem:[%s449 + $0x58] sm:$0xff] %vm994, %v1206
        %1223 = vst.msk [vmem:[%s449 + $0x60] sm:$0xff] %vm994, %v1207
        %1224 = vst.msk [vmem:[%s449 + $0x68] sm:$0xff] %vm994, %v1208
        %1225 = vst.msk [vmem:[%s449 + $0x70] sm:$0xff] %vm994, %v1209
        %1226 = vst.msk [vmem:[%s449 + $0x78] sm:$0xff] %vm994, %v1210
        %p1227 = scmp.lt.s32.totalorder %s31, 1
        %s1228 = scalar_select %p1227, %s31, 1
        %p1229 = scmp.lt.s32.totalorder %s32, 1
        %s1230 = scalar_select %p1229, %s32, 1
        %s1231 = smul.addr %s1228, 2
        %s1232 = sadd.s32 %s1230, %s1231
        %s1233 = smul.addr %s1232, 8
        %s1234 = scalar_lea.vmem %s9, %s1233
        %s1235 = sand.u32 %s281, 1
        %s1236 = scalar_lea.sflag [#allocation4], %s1235
        %s1237 = sand.u32 %s281, 1
        %s1238 = smul.addr %s1237, 128
        %s1239 = scalar_lea.vmem [#allocation8], %s1238
        // Predicated region
        $region69: #{tpu_custom_call.1} parent=55 // pred_check
          %p1240 = pneg %p263
        $region70: #{tpu_custom_call.1} parent=55 // pred_check_branch
          %1242 = sbr.rel (%p1240) target = $region72
        $region71: #{tpu_custom_call.1} parent=55 // pred_region
          _
        $region72: #{tpu_custom_call.1} parent=55 // pred_fallthru
          _
        // Predicated region
        $region73: #{tpu_custom_call.1} parent=55 // pred_check
          %p1243 = pneg %p291
        $region74: #{tpu_custom_call.1} parent=55 // pred_check_branch
          %1245 = sbr.rel (%p1243) target = $region76
        $region75: #{tpu_custom_call.1} parent=55 // pred_region
          %s1246 = smul.u32 8, %s32
          %s1248 = ssub.s32 2048, 2048
          %1249 = vsyncadd %s1236, %s1248
          %s1250 = smul.addr %s1246, 2
          %s1251 = smul.addr %s31, 32
          %s1252 = sadd.s32 %s1250, %s1251
          %s1253 = smul.addr %s1252, 128
          %s1254 = scalar_lea.hbm %s10, %s1253
          %s1255 = sshll.u32 %s1239, 4
          %s1256 = int_to_ptr.vmem [resolvable:$true] %s1255
          %1261 = dma.vmem_to_hbm [thread:$0]  %s1256, 2048, %s1254, %s1236, 128, 128, 8
        $region76: #{tpu_custom_call.1} parent=55 // pred_fallthru
          _
      $region56: #{tpu_custom_call.1} parent=5 // pred_fallthru
        _
      %p1262 = scmp.le.s32.totalorder 2, %s22
      // Predicated region
      $region77: #{tpu_custom_call.1} parent=5 // pred_check
        %p1263 = pneg %p1262
      $region78: #{tpu_custom_call.1} parent=5 // pred_check_branch
        %1265 = sbr.rel (%p1263) target = $region80
      $region79: #{tpu_custom_call.1} parent=5 // pred_region
        %s1266 = ssub.s32 %s22, 2
        // Predicated region
        $region81: #{tpu_custom_call.1} parent=79 // pred_check
          %p1267 = pneg %p269
        $region82: #{tpu_custom_call.1} parent=79 // pred_check_branch
          %1269 = sbr.rel (%p1267) target = $region84
        $region83: #{tpu_custom_call.1} parent=79 // pred_region
          %p1270 = scmp.lt.s32.totalorder %s33, 1
          %s1271 = scalar_select %p1270, %s33, 1
          %p1272 = scmp.lt.s32.totalorder %s34, 1
          %s1273 = scalar_select %p1272, %s34, 1
          %s1274 = smul.addr %s1271, 2
          %s1275 = sadd.s32 %s1273, %s1274
          %s1276 = smul.addr %s1275, 8
          %s1277 = scalar_lea.vmem %s9, %s1276
        $region84: #{tpu_custom_call.1} parent=79 // pred_fallthru
          _
        // Predicated region
        $region85: #{tpu_custom_call.1} parent=79 // pred_check
          %p1278 = pneg %p297
        $region86: #{tpu_custom_call.1} parent=79 // pred_check_branch
          %1280 = sbr.rel (%p1278) target = $region88
        $region87: #{tpu_custom_call.1} parent=79 // pred_region
          %s1281 = sand.u32 %s282, 1
          %s1282 = scalar_lea.sflag [#allocation4], %s1281
          %s1283 = sand.u32 %s282, 1
          %s1284 = smul.addr %s1283, 128
          %s1285 = scalar_lea.vmem [#allocation8], %s1284
          %1286 = dma.done %s1282, 2048
        $region88: #{tpu_custom_call.1} parent=79 // pred_fallthru
          _
      $region80: #{tpu_custom_call.1} parent=5 // pred_fallthru
        _
    $region6: #{tpu_custom_call.1} parent=1 // loop_footer
      %s26 = sadd.s32 1, %s22
    $region7: #{tpu_custom_call.1} parent=1 // loop_footer_branch
      %21 = sbr.rel target = $region3
    $region8: #{tpu_custom_call.1} parent=1 // loop_exit
      _
    %1287 = vsyncpa [#allocation3], 1
    %s1288 = scalar_lea.sflag [#allocation3], 1
    %1289 = vsyncpa %s1288, 1
    %1290 = vsyncpa [#allocation6], 1
    %1291 = vsyncpa [#allocation4], 1
    %s1292 = scalar_lea.sflag [#allocation4], 1
    %1293 = vsyncpa %s1292, 1

</llo_original>
